<compile_context>
chip_gen: v5e
topology: v5e:2x2
jax: 0.10.0
libtpu: 0.0.40
codegen_flags: <defaults>
</compile_context>

<pallas_src>
import functools

import numpy as np
import jax
import jax.numpy as jnp
from jax.experimental import pallas as pl
from jax.experimental.pallas import tpu as pltpu

_BN_EPS = 1e-5
_K = 7        # conv kernel size
_PAD = 3      # (7 - 1) // 2


def _gate(p_max, p_mean, m_ref, bias, inv_branches):
    """sigmoid(BN(conv7x7(ZPool map))) * inv_branches for one (A, B) pooled map.

    Per row-tap d of the 7x7 'same' conv:
        q_d  = P @ M[d]                       (column taps: banded bf16 matrix, MXU)
        out += mask_d * roll(q_d, 3 - d, 0)   (row taps: XLU sublane roll + VPU mask)
    with P = concat([p_max, p_mean], axis=1) in bf16 and f32 accumulation.
    """
    a_dim, b_dim = p_max.shape
    p = jnp.concatenate([p_max, p_mean], axis=1).astype(jnp.bfloat16)   # (A, 2B)
    # Hoisted out of the unrolled loop (JAX does not CSE broadcasts).
    row = jax.lax.broadcasted_iota(jnp.int32, (a_dim, b_dim), 0)
    acc = jnp.zeros((a_dim, b_dim), jnp.float32)
    for d in range(_K):                                   # static unroll: 7 MXU matmuls
        q = jnp.dot(p, m_ref[d], preferred_element_type=jnp.float32)    # (A, B)
        if d == _PAD:
            acc = acc + q
        else:
            q = pltpu.roll(q, (_PAD - d) % a_dim, 0)      # out[a] <- q[a + d - 3]
            if d < _PAD:
                mask = row >= (_PAD - d)                  # zero-pad top rows
            else:
                mask = row <= (a_dim - 1 + _PAD - d)      # zero-pad bottom rows
            acc = acc + jnp.where(mask, q, 0.0)
    z = acc + bias                                        # folded BatchNorm bias
    s = pl.reciprocal(1.0 + jnp.exp(-z), approx=True)     # sigmoid (divide on the EUP)
    return s * inv_branches                               # fold the 1/3 (or 1/2) average


def _triplet_kernel(no_spatial, inv_branches, x_ref, m_cw_ref, m_hc_ref, *rest):
    """One batch element per grid step; all gate branches fused in VMEM."""
    if no_spatial:
        bias_ref, o_ref = rest
        m_hw_ref = None
    else:
        m_hw_ref, bias_ref, o_ref = rest

    x = x_ref[0]                                          # (C, H, W), kept in input dtype

    # cw branch: ZPool over H -> (C, W) map, scale broadcast along H.
    s_cw = _gate(jnp.max(x, axis=1).astype(jnp.float32),
                 jnp.mean(x, axis=1).astype(jnp.float32),
                 m_cw_ref, bias_ref[1], inv_branches)
    # hc branch: ZPool over W -> (C, H) map (conv spatial axes pre-swapped on the host to
    # match the reference's (H, C) orientation), scale broadcast along W.
    s_hc = _gate(jnp.max(x, axis=2).astype(jnp.float32),
                 jnp.mean(x, axis=2).astype(jnp.float32),
                 m_hc_ref, bias_ref[2], inv_branches)

    scale = s_cw[:, None, :] + s_hc[:, :, None]           # (C, H, W) gate sum
    if not no_spatial:
        # hw branch: ZPool over C -> (H, W) map, scale broadcast along C.
        s_hw = _gate(jnp.max(x, axis=0).astype(jnp.float32),
                     jnp.mean(x, axis=0).astype(jnp.float32),
                     m_hw_ref, bias_ref[0], inv_branches)
        scale = scale + s_hw[None, :, :]

    # Factored epilogue: a single full-slab multiply (x never upcast to f32).
    o_ref[0] = (x * scale.astype(x.dtype)).astype(o_ref.dtype)


def _fold_bn(gate_params):
    """Fold eval-mode BatchNorm into the conv weights / a scalar bias."""
    conv_w, gamma, beta, mean, var = (np.asarray(p, np.float32) for p in gate_params)
    bn_scale = float(gamma[0] / np.sqrt(var[0] + _BN_EPS))
    kw = conv_w[0] * bn_scale                              # (2, 7, 7)
    bias = float(beta[0] - mean[0] * bn_scale)
    return kw, bias


def _tap_matrices(kw, b_dim):
    """Pack the column-axis taps of the 7x7 conv into banded bf16 matrices.

    Returns M with shape (7, 2*b_dim, b_dim):
        M[d, ch*b_dim + bi, bo] = kw[ch, d, e]  where bi = bo + e - 3 in [0, b_dim)
    so that q_d = concat([p_max, p_mean], axis=1) @ M[d] is the column-conv of row-tap d.
    """
    kw = np.asarray(kw, np.float32)
    m = np.zeros((_K, 2 * b_dim, b_dim), np.float32)
    for ch in range(2):
        for d in range(_K):
            for e in range(_K):
                w_de = kw[ch, d, e]
                lo = max(0, _PAD - e)
                hi = min(b_dim, b_dim + _PAD - e)
                for bo in range(lo, hi):
                    m[d, ch * b_dim + bo + e - _PAD, bo] = w_de
    return jnp.asarray(m, jnp.bfloat16)


def triplet_attention(x, params, no_spatial=False):
    """Pallas forward of TripletAttention (inference-mode BatchNorm).

    x:      (N, C, H, W)
    params: dict with keys 'hw', 'cw', 'hc' ('hw' unused when no_spatial), each a tuple
            (conv_w (1,2,7,7), bn_gamma (1,), bn_beta (1,), bn_mean (1,), bn_var (1,)).
    """
    # TODO(synk): BatchNorm2d is folded in inference mode (running stats); training-mode
    # batch-statistic BN is not computed in-kernel.
    n, c, h, w = map(int, x.shape)
    inv_branches = 0.5 if no_spatial else (1.0 / 3.0)

    kw_cw, b_cw = _fold_bn(params['cw'])
    m_cw = _tap_matrices(kw_cw, w)                                   # (7, 2W, W): (C, W) map
    kw_hc, b_hc = _fold_bn(params['hc'])
    m_hc = _tap_matrices(np.transpose(kw_hc, (0, 2, 1)), h)         # (7, 2H, H): (C, H) map

    operands = [x, m_cw, m_hc]
    in_specs = [
        pl.BlockSpec((1, c, h, w), lambda i: (i, 0, 0, 0)),          # x[n] slab
        pl.BlockSpec((_K, 2 * w, w), lambda i: (0, 0, 0)),           # cw banded taps (bf16)
        pl.BlockSpec((_K, 2 * h, h), lambda i: (0, 0, 0)),           # hc banded taps (bf16)
    ]
    b_hw = 0.0
    if not no_spatial:
        kw_hw, b_hw = _fold_bn(params['hw'])
        m_hw = _tap_matrices(kw_hw, w)                               # (7, 2W, W): (H, W) map
        operands.append(m_hw)
        in_specs.append(pl.BlockSpec((_K, 2 * w, w), lambda i: (0, 0, 0)))
    operands.append(jnp.asarray([b_hw, b_cw, b_hc], jnp.float32))    # folded BN biases
    in_specs.append(pl.BlockSpec(memory_space=pltpu.MemorySpace.SMEM))

    # Scoped-VMEM budget: lane-padded (C, H, W) slab, double-buffered in/out + f32 gate sum.
    itemsize = jnp.dtype(x.dtype).itemsize
    padded_slab = c * (-(-h // 8) * 8) * (-(-w // 128) * 128) * itemsize
    vmem_limit = int(min(64 * 2**20, max(32 * 2**20, 6 * padded_slab)))
    # TODO(synk): for large detector slabs (v7x 64 MiB / v5e scoped default) switch to a
    # two-pass structure (pass 1: gate maps; pass 2: tiled broadcast-scale) and present a
    # lane-dense (N, C, H*W) layout for the scale/store path when W < 128.

    # Advisory cost hint: memory-bound on x (1 read + 1 write per element).
    gate_flops = 2 * _K * (c * 2 * w * w + c * 2 * h * h
                           + (0 if no_spatial else h * 2 * w * w))
    cost = pl.CostEstimate(
        flops=int(n * (gate_flops + 10 * c * h * w)),
        transcendentals=int(n * (c * w + c * h + (0 if no_spatial else h * w))),
        bytes_accessed=int(2 * n * c * h * w * itemsize),
    )

    kernel = functools.partial(_triplet_kernel, no_spatial, inv_branches)
    return pl.pallas_call(
        kernel,
        out_shape=jax.ShapeDtypeStruct((n, c, h, w), x.dtype),
        grid=(n,),
        in_specs=in_specs,
        out_specs=pl.BlockSpec((1, c, h, w), lambda i: (i, 0, 0, 0)),
        compiler_params=pltpu.CompilerParams(
            dimension_semantics=("parallel",),            # v7x: shard batch over the 2 TCs
            vmem_limit_bytes=vmem_limit),
        cost_estimate=cost,
    )(*operands)


# ---------------------------------------------------------------------------
# Pure-JAX reference (mirrors the PyTorch module, eval-mode BatchNorm).
# ---------------------------------------------------------------------------
def _gate_ref(x, gate_params):
    conv_w, gamma, beta, mean, var = (jnp.asarray(p, jnp.float32) for p in gate_params)
    pooled = jnp.stack([jnp.max(x, axis=1), jnp.mean(x, axis=1)], axis=1)   # ZPool
    y = jax.lax.conv_general_dilated(
        pooled, conv_w, window_strides=(1, 1), padding=((3, 3), (3, 3)),
        dimension_numbers=('NCHW', 'OIHW', 'NCHW'),
        precision=jax.lax.Precision.HIGHEST)
    y = gamma[None, :, None, None] * (y - mean[None, :, None, None]) \
        / jnp.sqrt(var[None, :, None, None] + _BN_EPS) + beta[None, :, None, None]
    return x * jax.nn.sigmoid(y)


def triplet_attention_ref(x, params, no_spatial=False):
    x = x.astype(jnp.float32)
    o_cw = jnp.transpose(_gate_ref(jnp.transpose(x, (0, 2, 1, 3)), params['cw']), (0, 2, 1, 3))
    o_hc = jnp.transpose(_gate_ref(jnp.transpose(x, (0, 3, 2, 1)), params['hc']), (0, 3, 2, 1))
    if no_spatial:
        return 0.5 * (o_cw + o_hc)
    o_hw = _gate_ref(x, params['hw'])
    return (1.0 / 3.0) * (o_hw + o_cw + o_hc)


if __name__ == "__main__":
    key = jax.random.PRNGKey(0)
    n, c, h, w = 2, 8, 16, 16
    ks = jax.random.split(key, 4)

    x = jax.random.normal(ks[0], (n, c, h, w), dtype=jnp.float32)

    def make_gate_params(k):
        k1, k2, k3, k4, k5 = jax.random.split(k, 5)
        conv_w = 0.2 * jax.random.normal(k1, (1, 2, 7, 7), jnp.float32)
        gamma = jax.random.uniform(k2, (1,), jnp.float32, 0.8, 1.2)
        beta = 0.3 * jax.random.normal(k3, (1,), jnp.float32)
        mean = 0.3 * jax.random.normal(k4, (1,), jnp.float32)
        var = jax.random.uniform(k5, (1,), jnp.float32, 0.5, 1.5)
        return (conv_w, gamma, beta, mean, var)

    params = {'hw': make_gate_params(ks[1]),
              'cw': make_gate_params(ks[2]),
              'hc': make_gate_params(ks[3])}

    out = jax.block_until_ready(triplet_attention(x, params, no_spatial=False))
    ref = triplet_attention_ref(x, params, no_spatial=False)
    assert out.shape == (n, c, h, w)
    err = float(jnp.max(jnp.abs(out - ref)))
    # bf16 MXU operands + approx-reciprocal sigmoid vs. the f32 HIGHEST-precision reference:
    # expected max error is a few 1e-3; 3e-2 leaves margin while still catching any
    # structural/orientation bug (which would be O(1)).
    assert err < 3e-2, f"max |err| = {err}"

    out_ns = jax.block_until_ready(triplet_attention(x, params, no_spatial=True))
    ref_ns = triplet_attention_ref(x, params, no_spatial=True)
    err_ns = float(jnp.max(jnp.abs(out_ns - ref_ns)))
    assert err_ns < 3e-2, f"max |err| (no_spatial) = {err_ns}"

    print("KERNEL_OK")
</pallas_src>

<mosaic_0001>
module attributes {stable_mosaic.version = 11 : i64} {
  func.func @_triplet_kernel(%arg0: i32, %arg1: memref<1x8x16x16xf32, #tpu.memory_space<vmem>>, %arg2: memref<7x32x16xbf16, #tpu.memory_space<vmem>>, %arg3: memref<7x32x16xbf16, #tpu.memory_space<vmem>>, %arg4: memref<7x32x16xbf16, #tpu.memory_space<vmem>>, %arg5: memref<3xf32, #tpu.memory_space<smem>>, %arg6: memref<1x8x16x16xf32, #tpu.memory_space<vmem>>) attributes {dimension_semantics = [#tpu.dimension_semantics<parallel>], iteration_bounds = array<i64: 2>, scalar_prefetch = 0 : i64, scratch_operands = 0 : i64, tpu.core_type = #tpu.core_type<tc>, window_params = [{transform_indices = @transform_0, window_bounds = array<i64: 1, 8, 16, 16>}, {pipeline_mode = #tpu.pipeline_mode<synchronous>, transform_indices = @transform_1, window_bounds = array<i64: 7, 32, 16>}, {pipeline_mode = #tpu.pipeline_mode<synchronous>, transform_indices = @transform_2, window_bounds = array<i64: 7, 32, 16>}, {pipeline_mode = #tpu.pipeline_mode<synchronous>, transform_indices = @transform_3, window_bounds = array<i64: 7, 32, 16>}, {transform_indices = @transform_4, window_bounds = array<i64: 3>}, {transform_indices = @transform_5, window_bounds = array<i64: 1, 8, 16, 16>}]} {
    %c0 = arith.constant 0 : index
    %c0_0 = arith.constant 0 : index
    %c0_1 = arith.constant 0 : index
    %c0_2 = arith.constant 0 : index
    %0 = vector.load %arg1[%c0, %c0_0, %c0_1, %c0_2] : memref<1x8x16x16xf32, #tpu.memory_space<vmem>>, vector<1x8x16x16xf32>
    %1 = vector.shape_cast %0 : vector<1x8x16x16xf32> to vector<8x16x16xf32>
    %cst = arith.constant dense<0xFF800000> : vector<8x16xf32>
    %2 = vector.multi_reduction <maximumf>, %1, %cst [1] : vector<8x16x16xf32> to vector<8x16xf32>
    %cst_3 = arith.constant dense<0.000000e+00> : vector<8x16xf32>
    %3 = vector.multi_reduction <add>, %1, %cst_3 [1] : vector<8x16x16xf32> to vector<8x16xf32>
    %cst_4 = arith.constant 1.600000e+01 : f32
    %4 = vector.broadcast %cst_4 : f32 to vector<8x16xf32>
    %5 = arith.divf %3, %4 : vector<8x16xf32>
    %c1 = arith.constant 1 : index
    %6 = memref.load %arg5[%c1] : memref<3xf32, #tpu.memory_space<smem>>
    %7 = tpu.concatenate %2, %5 in 1 : vector<8x16xf32>, vector<8x16xf32> -> vector<8x32xf32>
    %8 = arith.truncf %7 : vector<8x32xf32> to vector<8x32xbf16>
    %9 = tpu.iota {dimensions = array<i32: 0>} : vector<8x16xi32>
    %cst_5 = arith.constant 0.000000e+00 : f32
    %10 = vector.broadcast %cst_5 : f32 to vector<8x16xf32>
    %c0_6 = arith.constant 0 : index
    %c0_7 = arith.constant 0 : index
    %c0_8 = arith.constant 0 : index
    %11 = vector.load %arg2[%c0_6, %c0_7, %c0_8] : memref<7x32x16xbf16, #tpu.memory_space<vmem>>, vector<1x32x16xbf16>
    %12 = vector.shape_cast %11 : vector<1x32x16xbf16> to vector<32x16xbf16>
    %cst_9 = arith.constant dense<0.000000e+00> : vector<8x16xf32>
    %13 = tpu.matmul %8, %12, %cst_9 {dimension_numbers = #tpu.dot_dimension_numbers<[1], [0], [0], [1], [0, 0, 1, 1], [], []>} : vector<8x32xbf16>, vector<32x16xbf16>, vector<8x16xf32> -> vector<8x16xf32>
    %c3_i32 = arith.constant 3 : i32
    %14 = tpu.dynamic_rotate %13 by %c3_i32 dim 0 : vector<8x16xf32>, i32 -> vector<8x16xf32>
    %c3_i32_10 = arith.constant 3 : i32
    %15 = vector.broadcast %c3_i32_10 : i32 to vector<8x16xi32>
    %16 = arith.cmpi sge, %9, %15 : vector<8x16xi32>
    %cst_11 = arith.constant 0.000000e+00 : f32
    %17 = vector.broadcast %cst_11 : f32 to vector<8x16xf32>
    %18 = arith.select %16, %14, %17 : vector<8x16xi1>, vector<8x16xf32>
    %19 = arith.addf %10, %18 : vector<8x16xf32>
    %c1_12 = arith.constant 1 : index
    %c0_13 = arith.constant 0 : index
    %c0_14 = arith.constant 0 : index
    %20 = vector.load %arg2[%c1_12, %c0_13, %c0_14] : memref<7x32x16xbf16, #tpu.memory_space<vmem>>, vector<1x32x16xbf16>
    %21 = vector.shape_cast %20 : vector<1x32x16xbf16> to vector<32x16xbf16>
    %cst_15 = arith.constant dense<0.000000e+00> : vector<8x16xf32>
    %22 = tpu.matmul %8, %21, %cst_15 {dimension_numbers = #tpu.dot_dimension_numbers<[1], [0], [0], [1], [0, 0, 1, 1], [], []>} : vector<8x32xbf16>, vector<32x16xbf16>, vector<8x16xf32> -> vector<8x16xf32>
    %c2_i32 = arith.constant 2 : i32
    %23 = tpu.dynamic_rotate %22 by %c2_i32 dim 0 : vector<8x16xf32>, i32 -> vector<8x16xf32>
    %c2_i32_16 = arith.constant 2 : i32
    %24 = vector.broadcast %c2_i32_16 : i32 to vector<8x16xi32>
    %25 = arith.cmpi sge, %9, %24 : vector<8x16xi32>
    %cst_17 = arith.constant 0.000000e+00 : f32
    %26 = vector.broadcast %cst_17 : f32 to vector<8x16xf32>
    %27 = arith.select %25, %23, %26 : vector<8x16xi1>, vector<8x16xf32>
    %28 = arith.addf %19, %27 : vector<8x16xf32>
    %c2 = arith.constant 2 : index
    %c0_18 = arith.constant 0 : index
    %c0_19 = arith.constant 0 : index
    %29 = vector.load %arg2[%c2, %c0_18, %c0_19] : memref<7x32x16xbf16, #tpu.memory_space<vmem>>, vector<1x32x16xbf16>
    %30 = vector.shape_cast %29 : vector<1x32x16xbf16> to vector<32x16xbf16>
    %cst_20 = arith.constant dense<0.000000e+00> : vector<8x16xf32>
    %31 = tpu.matmul %8, %30, %cst_20 {dimension_numbers = #tpu.dot_dimension_numbers<[1], [0], [0], [1], [0, 0, 1, 1], [], []>} : vector<8x32xbf16>, vector<32x16xbf16>, vector<8x16xf32> -> vector<8x16xf32>
    %c1_i32 = arith.constant 1 : i32
    %32 = tpu.dynamic_rotate %31 by %c1_i32 dim 0 : vector<8x16xf32>, i32 -> vector<8x16xf32>
    %c1_i32_21 = arith.constant 1 : i32
    %33 = vector.broadcast %c1_i32_21 : i32 to vector<8x16xi32>
    %34 = arith.cmpi sge, %9, %33 : vector<8x16xi32>
    %cst_22 = arith.constant 0.000000e+00 : f32
    %35 = vector.broadcast %cst_22 : f32 to vector<8x16xf32>
    %36 = arith.select %34, %32, %35 : vector<8x16xi1>, vector<8x16xf32>
    %37 = arith.addf %28, %36 : vector<8x16xf32>
    %c3 = arith.constant 3 : index
    %c0_23 = arith.constant 0 : index
    %c0_24 = arith.constant 0 : index
    %38 = vector.load %arg2[%c3, %c0_23, %c0_24] : memref<7x32x16xbf16, #tpu.memory_space<vmem>>, vector<1x32x16xbf16>
    %39 = vector.shape_cast %38 : vector<1x32x16xbf16> to vector<32x16xbf16>
    %cst_25 = arith.constant dense<0.000000e+00> : vector<8x16xf32>
    %40 = tpu.matmul %8, %39, %cst_25 {dimension_numbers = #tpu.dot_dimension_numbers<[1], [0], [0], [1], [0, 0, 1, 1], [], []>} : vector<8x32xbf16>, vector<32x16xbf16>, vector<8x16xf32> -> vector<8x16xf32>
    %41 = arith.addf %37, %40 : vector<8x16xf32>
    %c4 = arith.constant 4 : index
    %c0_26 = arith.constant 0 : index
    %c0_27 = arith.constant 0 : index
    %42 = vector.load %arg2[%c4, %c0_26, %c0_27] : memref<7x32x16xbf16, #tpu.memory_space<vmem>>, vector<1x32x16xbf16>
    %43 = vector.shape_cast %42 : vector<1x32x16xbf16> to vector<32x16xbf16>
    %cst_28 = arith.constant dense<0.000000e+00> : vector<8x16xf32>
    %44 = tpu.matmul %8, %43, %cst_28 {dimension_numbers = #tpu.dot_dimension_numbers<[1], [0], [0], [1], [0, 0, 1, 1], [], []>} : vector<8x32xbf16>, vector<32x16xbf16>, vector<8x16xf32> -> vector<8x16xf32>
    %c7_i32 = arith.constant 7 : i32
    %45 = tpu.dynamic_rotate %44 by %c7_i32 dim 0 : vector<8x16xf32>, i32 -> vector<8x16xf32>
    %c6_i32 = arith.constant 6 : i32
    %46 = vector.broadcast %c6_i32 : i32 to vector<8x16xi32>
    %47 = arith.cmpi sle, %9, %46 : vector<8x16xi32>
    %cst_29 = arith.constant 0.000000e+00 : f32
    %48 = vector.broadcast %cst_29 : f32 to vector<8x16xf32>
    %49 = arith.select %47, %45, %48 : vector<8x16xi1>, vector<8x16xf32>
    %50 = arith.addf %41, %49 : vector<8x16xf32>
    %c5 = arith.constant 5 : index
    %c0_30 = arith.constant 0 : index
    %c0_31 = arith.constant 0 : index
    %51 = vector.load %arg2[%c5, %c0_30, %c0_31] : memref<7x32x16xbf16, #tpu.memory_space<vmem>>, vector<1x32x16xbf16>
    %52 = vector.shape_cast %51 : vector<1x32x16xbf16> to vector<32x16xbf16>
    %cst_32 = arith.constant dense<0.000000e+00> : vector<8x16xf32>
    %53 = tpu.matmul %8, %52, %cst_32 {dimension_numbers = #tpu.dot_dimension_numbers<[1], [0], [0], [1], [0, 0, 1, 1], [], []>} : vector<8x32xbf16>, vector<32x16xbf16>, vector<8x16xf32> -> vector<8x16xf32>
    %c6_i32_33 = arith.constant 6 : i32
    %54 = tpu.dynamic_rotate %53 by %c6_i32_33 dim 0 : vector<8x16xf32>, i32 -> vector<8x16xf32>
    %c5_i32 = arith.constant 5 : i32
    %55 = vector.broadcast %c5_i32 : i32 to vector<8x16xi32>
    %56 = arith.cmpi sle, %9, %55 : vector<8x16xi32>
    %cst_34 = arith.constant 0.000000e+00 : f32
    %57 = vector.broadcast %cst_34 : f32 to vector<8x16xf32>
    %58 = arith.select %56, %54, %57 : vector<8x16xi1>, vector<8x16xf32>
    %59 = arith.addf %50, %58 : vector<8x16xf32>
    %c6 = arith.constant 6 : index
    %c0_35 = arith.constant 0 : index
    %c0_36 = arith.constant 0 : index
    %60 = vector.load %arg2[%c6, %c0_35, %c0_36] : memref<7x32x16xbf16, #tpu.memory_space<vmem>>, vector<1x32x16xbf16>
    %61 = vector.shape_cast %60 : vector<1x32x16xbf16> to vector<32x16xbf16>
    %cst_37 = arith.constant dense<0.000000e+00> : vector<8x16xf32>
    %62 = tpu.matmul %8, %61, %cst_37 {dimension_numbers = #tpu.dot_dimension_numbers<[1], [0], [0], [1], [0, 0, 1, 1], [], []>} : vector<8x32xbf16>, vector<32x16xbf16>, vector<8x16xf32> -> vector<8x16xf32>
    %c5_i32_38 = arith.constant 5 : i32
    %63 = tpu.dynamic_rotate %62 by %c5_i32_38 dim 0 : vector<8x16xf32>, i32 -> vector<8x16xf32>
    %c4_i32 = arith.constant 4 : i32
    %64 = vector.broadcast %c4_i32 : i32 to vector<8x16xi32>
    %65 = arith.cmpi sle, %9, %64 : vector<8x16xi32>
    %cst_39 = arith.constant 0.000000e+00 : f32
    %66 = vector.broadcast %cst_39 : f32 to vector<8x16xf32>
    %67 = arith.select %65, %63, %66 : vector<8x16xi1>, vector<8x16xf32>
    %68 = arith.addf %59, %67 : vector<8x16xf32>
    %69 = vector.broadcast %6 : f32 to vector<8x16xf32>
    %70 = arith.addf %68, %69 : vector<8x16xf32>
    %cst_40 = arith.constant 0.000000e+00 : f32
    %71 = vector.broadcast %cst_40 : f32 to vector<8x16xf32>
    %72 = arith.subf %71, %70 : vector<8x16xf32>
    %73 = math.exp %72 : vector<8x16xf32>
    %cst_41 = arith.constant 1.000000e+00 : f32
    %74 = vector.broadcast %cst_41 : f32 to vector<8x16xf32>
    %75 = arith.addf %74, %73 : vector<8x16xf32>
    %76 = tpu.reciprocal %75 {approx = true} : vector<8x16xf32> -> vector<8x16xf32>
    %cst_42 = arith.constant 0.333333343 : f32
    %77 = vector.broadcast %cst_42 : f32 to vector<8x16xf32>
    %78 = arith.mulf %76, %77 : vector<8x16xf32>
    %cst_43 = arith.constant dense<0xFF800000> : vector<8x16xf32>
    %79 = vector.multi_reduction <maximumf>, %1, %cst_43 [2] : vector<8x16x16xf32> to vector<8x16xf32>
    %cst_44 = arith.constant dense<0.000000e+00> : vector<8x16xf32>
    %80 = vector.multi_reduction <add>, %1, %cst_44 [2] : vector<8x16x16xf32> to vector<8x16xf32>
    %cst_45 = arith.constant 1.600000e+01 : f32
    %81 = vector.broadcast %cst_45 : f32 to vector<8x16xf32>
    %82 = arith.divf %80, %81 : vector<8x16xf32>
    %c2_46 = arith.constant 2 : index
    %83 = memref.load %arg5[%c2_46] : memref<3xf32, #tpu.memory_space<smem>>
    %84 = tpu.concatenate %79, %82 in 1 : vector<8x16xf32>, vector<8x16xf32> -> vector<8x32xf32>
    %85 = arith.truncf %84 : vector<8x32xf32> to vector<8x32xbf16>
    %86 = tpu.iota {dimensions = array<i32: 0>} : vector<8x16xi32>
    %cst_47 = arith.constant 0.000000e+00 : f32
    %87 = vector.broadcast %cst_47 : f32 to vector<8x16xf32>
    %c0_48 = arith.constant 0 : index
    %c0_49 = arith.constant 0 : index
    %c0_50 = arith.constant 0 : index
    %88 = vector.load %arg3[%c0_48, %c0_49, %c0_50] : memref<7x32x16xbf16, #tpu.memory_space<vmem>>, vector<1x32x16xbf16>
    %89 = vector.shape_cast %88 : vector<1x32x16xbf16> to vector<32x16xbf16>
    %cst_51 = arith.constant dense<0.000000e+00> : vector<8x16xf32>
    %90 = tpu.matmul %85, %89, %cst_51 {dimension_numbers = #tpu.dot_dimension_numbers<[1], [0], [0], [1], [0, 0, 1, 1], [], []>} : vector<8x32xbf16>, vector<32x16xbf16>, vector<8x16xf32> -> vector<8x16xf32>
    %c3_i32_52 = arith.constant 3 : i32
    %91 = tpu.dynamic_rotate %90 by %c3_i32_52 dim 0 : vector<8x16xf32>, i32 -> vector<8x16xf32>
    %c3_i32_53 = arith.constant 3 : i32
    %92 = vector.broadcast %c3_i32_53 : i32 to vector<8x16xi32>
    %93 = arith.cmpi sge, %86, %92 : vector<8x16xi32>
    %cst_54 = arith.constant 0.000000e+00 : f32
    %94 = vector.broadcast %cst_54 : f32 to vector<8x16xf32>
    %95 = arith.select %93, %91, %94 : vector<8x16xi1>, vector<8x16xf32>
    %96 = arith.addf %87, %95 : vector<8x16xf32>
    %c1_55 = arith.constant 1 : index
    %c0_56 = arith.constant 0 : index
    %c0_57 = arith.constant 0 : index
    %97 = vector.load %arg3[%c1_55, %c0_56, %c0_57] : memref<7x32x16xbf16, #tpu.memory_space<vmem>>, vector<1x32x16xbf16>
    %98 = vector.shape_cast %97 : vector<1x32x16xbf16> to vector<32x16xbf16>
    %cst_58 = arith.constant dense<0.000000e+00> : vector<8x16xf32>
    %99 = tpu.matmul %85, %98, %cst_58 {dimension_numbers = #tpu.dot_dimension_numbers<[1], [0], [0], [1], [0, 0, 1, 1], [], []>} : vector<8x32xbf16>, vector<32x16xbf16>, vector<8x16xf32> -> vector<8x16xf32>
    %c2_i32_59 = arith.constant 2 : i32
    %100 = tpu.dynamic_rotate %99 by %c2_i32_59 dim 0 : vector<8x16xf32>, i32 -> vector<8x16xf32>
    %c2_i32_60 = arith.constant 2 : i32
    %101 = vector.broadcast %c2_i32_60 : i32 to vector<8x16xi32>
    %102 = arith.cmpi sge, %86, %101 : vector<8x16xi32>
    %cst_61 = arith.constant 0.000000e+00 : f32
    %103 = vector.broadcast %cst_61 : f32 to vector<8x16xf32>
    %104 = arith.select %102, %100, %103 : vector<8x16xi1>, vector<8x16xf32>
    %105 = arith.addf %96, %104 : vector<8x16xf32>
    %c2_62 = arith.constant 2 : index
    %c0_63 = arith.constant 0 : index
    %c0_64 = arith.constant 0 : index
    %106 = vector.load %arg3[%c2_62, %c0_63, %c0_64] : memref<7x32x16xbf16, #tpu.memory_space<vmem>>, vector<1x32x16xbf16>
    %107 = vector.shape_cast %106 : vector<1x32x16xbf16> to vector<32x16xbf16>
    %cst_65 = arith.constant dense<0.000000e+00> : vector<8x16xf32>
    %108 = tpu.matmul %85, %107, %cst_65 {dimension_numbers = #tpu.dot_dimension_numbers<[1], [0], [0], [1], [0, 0, 1, 1], [], []>} : vector<8x32xbf16>, vector<32x16xbf16>, vector<8x16xf32> -> vector<8x16xf32>
    %c1_i32_66 = arith.constant 1 : i32
    %109 = tpu.dynamic_rotate %108 by %c1_i32_66 dim 0 : vector<8x16xf32>, i32 -> vector<8x16xf32>
    %c1_i32_67 = arith.constant 1 : i32
    %110 = vector.broadcast %c1_i32_67 : i32 to vector<8x16xi32>
    %111 = arith.cmpi sge, %86, %110 : vector<8x16xi32>
    %cst_68 = arith.constant 0.000000e+00 : f32
    %112 = vector.broadcast %cst_68 : f32 to vector<8x16xf32>
    %113 = arith.select %111, %109, %112 : vector<8x16xi1>, vector<8x16xf32>
    %114 = arith.addf %105, %113 : vector<8x16xf32>
    %c3_69 = arith.constant 3 : index
    %c0_70 = arith.constant 0 : index
    %c0_71 = arith.constant 0 : index
    %115 = vector.load %arg3[%c3_69, %c0_70, %c0_71] : memref<7x32x16xbf16, #tpu.memory_space<vmem>>, vector<1x32x16xbf16>
    %116 = vector.shape_cast %115 : vector<1x32x16xbf16> to vector<32x16xbf16>
    %cst_72 = arith.constant dense<0.000000e+00> : vector<8x16xf32>
    %117 = tpu.matmul %85, %116, %cst_72 {dimension_numbers = #tpu.dot_dimension_numbers<[1], [0], [0], [1], [0, 0, 1, 1], [], []>} : vector<8x32xbf16>, vector<32x16xbf16>, vector<8x16xf32> -> vector<8x16xf32>
    %118 = arith.addf %114, %117 : vector<8x16xf32>
    %c4_73 = arith.constant 4 : index
    %c0_74 = arith.constant 0 : index
    %c0_75 = arith.constant 0 : index
    %119 = vector.load %arg3[%c4_73, %c0_74, %c0_75] : memref<7x32x16xbf16, #tpu.memory_space<vmem>>, vector<1x32x16xbf16>
    %120 = vector.shape_cast %119 : vector<1x32x16xbf16> to vector<32x16xbf16>
    %cst_76 = arith.constant dense<0.000000e+00> : vector<8x16xf32>
    %121 = tpu.matmul %85, %120, %cst_76 {dimension_numbers = #tpu.dot_dimension_numbers<[1], [0], [0], [1], [0, 0, 1, 1], [], []>} : vector<8x32xbf16>, vector<32x16xbf16>, vector<8x16xf32> -> vector<8x16xf32>
    %c7_i32_77 = arith.constant 7 : i32
    %122 = tpu.dynamic_rotate %121 by %c7_i32_77 dim 0 : vector<8x16xf32>, i32 -> vector<8x16xf32>
    %c6_i32_78 = arith.constant 6 : i32
    %123 = vector.broadcast %c6_i32_78 : i32 to vector<8x16xi32>
    %124 = arith.cmpi sle, %86, %123 : vector<8x16xi32>
    %cst_79 = arith.constant 0.000000e+00 : f32
    %125 = vector.broadcast %cst_79 : f32 to vector<8x16xf32>
    %126 = arith.select %124, %122, %125 : vector<8x16xi1>, vector<8x16xf32>
    %127 = arith.addf %118, %126 : vector<8x16xf32>
    %c5_80 = arith.constant 5 : index
    %c0_81 = arith.constant 0 : index
    %c0_82 = arith.constant 0 : index
    %128 = vector.load %arg3[%c5_80, %c0_81, %c0_82] : memref<7x32x16xbf16, #tpu.memory_space<vmem>>, vector<1x32x16xbf16>
    %129 = vector.shape_cast %128 : vector<1x32x16xbf16> to vector<32x16xbf16>
    %cst_83 = arith.constant dense<0.000000e+00> : vector<8x16xf32>
    %130 = tpu.matmul %85, %129, %cst_83 {dimension_numbers = #tpu.dot_dimension_numbers<[1], [0], [0], [1], [0, 0, 1, 1], [], []>} : vector<8x32xbf16>, vector<32x16xbf16>, vector<8x16xf32> -> vector<8x16xf32>
    %c6_i32_84 = arith.constant 6 : i32
    %131 = tpu.dynamic_rotate %130 by %c6_i32_84 dim 0 : vector<8x16xf32>, i32 -> vector<8x16xf32>
    %c5_i32_85 = arith.constant 5 : i32
    %132 = vector.broadcast %c5_i32_85 : i32 to vector<8x16xi32>
    %133 = arith.cmpi sle, %86, %132 : vector<8x16xi32>
    %cst_86 = arith.constant 0.000000e+00 : f32
    %134 = vector.broadcast %cst_86 : f32 to vector<8x16xf32>
    %135 = arith.select %133, %131, %134 : vector<8x16xi1>, vector<8x16xf32>
    %136 = arith.addf %127, %135 : vector<8x16xf32>
    %c6_87 = arith.constant 6 : index
    %c0_88 = arith.constant 0 : index
    %c0_89 = arith.constant 0 : index
    %137 = vector.load %arg3[%c6_87, %c0_88, %c0_89] : memref<7x32x16xbf16, #tpu.memory_space<vmem>>, vector<1x32x16xbf16>
    %138 = vector.shape_cast %137 : vector<1x32x16xbf16> to vector<32x16xbf16>
    %cst_90 = arith.constant dense<0.000000e+00> : vector<8x16xf32>
    %139 = tpu.matmul %85, %138, %cst_90 {dimension_numbers = #tpu.dot_dimension_numbers<[1], [0], [0], [1], [0, 0, 1, 1], [], []>} : vector<8x32xbf16>, vector<32x16xbf16>, vector<8x16xf32> -> vector<8x16xf32>
    %c5_i32_91 = arith.constant 5 : i32
    %140 = tpu.dynamic_rotate %139 by %c5_i32_91 dim 0 : vector<8x16xf32>, i32 -> vector<8x16xf32>
    %c4_i32_92 = arith.constant 4 : i32
    %141 = vector.broadcast %c4_i32_92 : i32 to vector<8x16xi32>
    %142 = arith.cmpi sle, %86, %141 : vector<8x16xi32>
    %cst_93 = arith.constant 0.000000e+00 : f32
    %143 = vector.broadcast %cst_93 : f32 to vector<8x16xf32>
    %144 = arith.select %142, %140, %143 : vector<8x16xi1>, vector<8x16xf32>
    %145 = arith.addf %136, %144 : vector<8x16xf32>
    %146 = vector.broadcast %83 : f32 to vector<8x16xf32>
    %147 = arith.addf %145, %146 : vector<8x16xf32>
    %cst_94 = arith.constant 0.000000e+00 : f32
    %148 = vector.broadcast %cst_94 : f32 to vector<8x16xf32>
    %149 = arith.subf %148, %147 : vector<8x16xf32>
    %150 = math.exp %149 : vector<8x16xf32>
    %cst_95 = arith.constant 1.000000e+00 : f32
    %151 = vector.broadcast %cst_95 : f32 to vector<8x16xf32>
    %152 = arith.addf %151, %150 : vector<8x16xf32>
    %153 = tpu.reciprocal %152 {approx = true} : vector<8x16xf32> -> vector<8x16xf32>
    %cst_96 = arith.constant 0.333333343 : f32
    %154 = vector.broadcast %cst_96 : f32 to vector<8x16xf32>
    %155 = arith.mulf %153, %154 : vector<8x16xf32>
    %156 = vector.shape_cast %78 : vector<8x16xf32> to vector<8x1x16xf32>
    %157 = vector.shape_cast %155 : vector<8x16xf32> to vector<8x16x1xf32>
    %158 = vector.broadcast %156 : vector<8x1x16xf32> to vector<8x16x16xf32>
    %159 = vector.broadcast %157 : vector<8x16x1xf32> to vector<8x16x16xf32>
    %160 = arith.addf %158, %159 : vector<8x16x16xf32>
    %cst_97 = arith.constant dense<0xFF800000> : vector<16x16xf32>
    %161 = vector.multi_reduction <maximumf>, %1, %cst_97 [0] : vector<8x16x16xf32> to vector<16x16xf32>
    %cst_98 = arith.constant dense<0.000000e+00> : vector<16x16xf32>
    %162 = vector.multi_reduction <add>, %1, %cst_98 [0] : vector<8x16x16xf32> to vector<16x16xf32>
    %cst_99 = arith.constant 8.000000e+00 : f32
    %163 = vector.broadcast %cst_99 : f32 to vector<16x16xf32>
    %164 = arith.divf %162, %163 : vector<16x16xf32>
    %c0_100 = arith.constant 0 : index
    %165 = memref.load %arg5[%c0_100] : memref<3xf32, #tpu.memory_space<smem>>
    %166 = tpu.concatenate %161, %164 in 1 : vector<16x16xf32>, vector<16x16xf32> -> vector<16x32xf32>
    %167 = arith.truncf %166 : vector<16x32xf32> to vector<16x32xbf16>
    %168 = tpu.iota {dimensions = array<i32: 0>} : vector<16x16xi32>
    %cst_101 = arith.constant 0.000000e+00 : f32
    %169 = vector.broadcast %cst_101 : f32 to vector<16x16xf32>
    %c0_102 = arith.constant 0 : index
    %c0_103 = arith.constant 0 : index
    %c0_104 = arith.constant 0 : index
    %170 = vector.load %arg4[%c0_102, %c0_103, %c0_104] : memref<7x32x16xbf16, #tpu.memory_space<vmem>>, vector<1x32x16xbf16>
    %171 = vector.shape_cast %170 : vector<1x32x16xbf16> to vector<32x16xbf16>
    %cst_105 = arith.constant dense<0.000000e+00> : vector<16x16xf32>
    %172 = tpu.matmul %167, %171, %cst_105 {dimension_numbers = #tpu.dot_dimension_numbers<[1], [0], [0], [1], [0, 0, 1, 1], [], []>} : vector<16x32xbf16>, vector<32x16xbf16>, vector<16x16xf32> -> vector<16x16xf32>
    %c3_i32_106 = arith.constant 3 : i32
    %173 = tpu.dynamic_rotate %172 by %c3_i32_106 dim 0 : vector<16x16xf32>, i32 -> vector<16x16xf32>
    %c3_i32_107 = arith.constant 3 : i32
    %174 = vector.broadcast %c3_i32_107 : i32 to vector<16x16xi32>
    %175 = arith.cmpi sge, %168, %174 : vector<16x16xi32>
    %cst_108 = arith.constant 0.000000e+00 : f32
    %176 = vector.broadcast %cst_108 : f32 to vector<16x16xf32>
    %177 = arith.select %175, %173, %176 : vector<16x16xi1>, vector<16x16xf32>
    %178 = arith.addf %169, %177 : vector<16x16xf32>
    %c1_109 = arith.constant 1 : index
    %c0_110 = arith.constant 0 : index
    %c0_111 = arith.constant 0 : index
    %179 = vector.load %arg4[%c1_109, %c0_110, %c0_111] : memref<7x32x16xbf16, #tpu.memory_space<vmem>>, vector<1x32x16xbf16>
    %180 = vector.shape_cast %179 : vector<1x32x16xbf16> to vector<32x16xbf16>
    %cst_112 = arith.constant dense<0.000000e+00> : vector<16x16xf32>
    %181 = tpu.matmul %167, %180, %cst_112 {dimension_numbers = #tpu.dot_dimension_numbers<[1], [0], [0], [1], [0, 0, 1, 1], [], []>} : vector<16x32xbf16>, vector<32x16xbf16>, vector<16x16xf32> -> vector<16x16xf32>
    %c2_i32_113 = arith.constant 2 : i32
    %182 = tpu.dynamic_rotate %181 by %c2_i32_113 dim 0 : vector<16x16xf32>, i32 -> vector<16x16xf32>
    %c2_i32_114 = arith.constant 2 : i32
    %183 = vector.broadcast %c2_i32_114 : i32 to vector<16x16xi32>
    %184 = arith.cmpi sge, %168, %183 : vector<16x16xi32>
    %cst_115 = arith.constant 0.000000e+00 : f32
    %185 = vector.broadcast %cst_115 : f32 to vector<16x16xf32>
    %186 = arith.select %184, %182, %185 : vector<16x16xi1>, vector<16x16xf32>
    %187 = arith.addf %178, %186 : vector<16x16xf32>
    %c2_116 = arith.constant 2 : index
    %c0_117 = arith.constant 0 : index
    %c0_118 = arith.constant 0 : index
    %188 = vector.load %arg4[%c2_116, %c0_117, %c0_118] : memref<7x32x16xbf16, #tpu.memory_space<vmem>>, vector<1x32x16xbf16>
    %189 = vector.shape_cast %188 : vector<1x32x16xbf16> to vector<32x16xbf16>
    %cst_119 = arith.constant dense<0.000000e+00> : vector<16x16xf32>
    %190 = tpu.matmul %167, %189, %cst_119 {dimension_numbers = #tpu.dot_dimension_numbers<[1], [0], [0], [1], [0, 0, 1, 1], [], []>} : vector<16x32xbf16>, vector<32x16xbf16>, vector<16x16xf32> -> vector<16x16xf32>
    %c1_i32_120 = arith.constant 1 : i32
    %191 = tpu.dynamic_rotate %190 by %c1_i32_120 dim 0 : vector<16x16xf32>, i32 -> vector<16x16xf32>
    %c1_i32_121 = arith.constant 1 : i32
    %192 = vector.broadcast %c1_i32_121 : i32 to vector<16x16xi32>
    %193 = arith.cmpi sge, %168, %192 : vector<16x16xi32>
    %cst_122 = arith.constant 0.000000e+00 : f32
    %194 = vector.broadcast %cst_122 : f32 to vector<16x16xf32>
    %195 = arith.select %193, %191, %194 : vector<16x16xi1>, vector<16x16xf32>
    %196 = arith.addf %187, %195 : vector<16x16xf32>
    %c3_123 = arith.constant 3 : index
    %c0_124 = arith.constant 0 : index
    %c0_125 = arith.constant 0 : index
    %197 = vector.load %arg4[%c3_123, %c0_124, %c0_125] : memref<7x32x16xbf16, #tpu.memory_space<vmem>>, vector<1x32x16xbf16>
    %198 = vector.shape_cast %197 : vector<1x32x16xbf16> to vector<32x16xbf16>
    %cst_126 = arith.constant dense<0.000000e+00> : vector<16x16xf32>
    %199 = tpu.matmul %167, %198, %cst_126 {dimension_numbers = #tpu.dot_dimension_numbers<[1], [0], [0], [1], [0, 0, 1, 1], [], []>} : vector<16x32xbf16>, vector<32x16xbf16>, vector<16x16xf32> -> vector<16x16xf32>
    %200 = arith.addf %196, %199 : vector<16x16xf32>
    %c4_127 = arith.constant 4 : index
    %c0_128 = arith.constant 0 : index
    %c0_129 = arith.constant 0 : index
    %201 = vector.load %arg4[%c4_127, %c0_128, %c0_129] : memref<7x32x16xbf16, #tpu.memory_space<vmem>>, vector<1x32x16xbf16>
    %202 = vector.shape_cast %201 : vector<1x32x16xbf16> to vector<32x16xbf16>
    %cst_130 = arith.constant dense<0.000000e+00> : vector<16x16xf32>
    %203 = tpu.matmul %167, %202, %cst_130 {dimension_numbers = #tpu.dot_dimension_numbers<[1], [0], [0], [1], [0, 0, 1, 1], [], []>} : vector<16x32xbf16>, vector<32x16xbf16>, vector<16x16xf32> -> vector<16x16xf32>
    %c15_i32 = arith.constant 15 : i32
    %204 = tpu.dynamic_rotate %203 by %c15_i32 dim 0 : vector<16x16xf32>, i32 -> vector<16x16xf32>
    %c14_i32 = arith.constant 14 : i32
    %205 = vector.broadcast %c14_i32 : i32 to vector<16x16xi32>
    %206 = arith.cmpi sle, %168, %205 : vector<16x16xi32>
    %cst_131 = arith.constant 0.000000e+00 : f32
    %207 = vector.broadcast %cst_131 : f32 to vector<16x16xf32>
    %208 = arith.select %206, %204, %207 : vector<16x16xi1>, vector<16x16xf32>
    %209 = arith.addf %200, %208 : vector<16x16xf32>
    %c5_132 = arith.constant 5 : index
    %c0_133 = arith.constant 0 : index
    %c0_134 = arith.constant 0 : index
    %210 = vector.load %arg4[%c5_132, %c0_133, %c0_134] : memref<7x32x16xbf16, #tpu.memory_space<vmem>>, vector<1x32x16xbf16>
    %211 = vector.shape_cast %210 : vector<1x32x16xbf16> to vector<32x16xbf16>
    %cst_135 = arith.constant dense<0.000000e+00> : vector<16x16xf32>
    %212 = tpu.matmul %167, %211, %cst_135 {dimension_numbers = #tpu.dot_dimension_numbers<[1], [0], [0], [1], [0, 0, 1, 1], [], []>} : vector<16x32xbf16>, vector<32x16xbf16>, vector<16x16xf32> -> vector<16x16xf32>
    %c14_i32_136 = arith.constant 14 : i32
    %213 = tpu.dynamic_rotate %212 by %c14_i32_136 dim 0 : vector<16x16xf32>, i32 -> vector<16x16xf32>
    %c13_i32 = arith.constant 13 : i32
    %214 = vector.broadcast %c13_i32 : i32 to vector<16x16xi32>
    %215 = arith.cmpi sle, %168, %214 : vector<16x16xi32>
    %cst_137 = arith.constant 0.000000e+00 : f32
    %216 = vector.broadcast %cst_137 : f32 to vector<16x16xf32>
    %217 = arith.select %215, %213, %216 : vector<16x16xi1>, vector<16x16xf32>
    %218 = arith.addf %209, %217 : vector<16x16xf32>
    %c6_138 = arith.constant 6 : index
    %c0_139 = arith.constant 0 : index
    %c0_140 = arith.constant 0 : index
    %219 = vector.load %arg4[%c6_138, %c0_139, %c0_140] : memref<7x32x16xbf16, #tpu.memory_space<vmem>>, vector<1x32x16xbf16>
    %220 = vector.shape_cast %219 : vector<1x32x16xbf16> to vector<32x16xbf16>
    %cst_141 = arith.constant dense<0.000000e+00> : vector<16x16xf32>
    %221 = tpu.matmul %167, %220, %cst_141 {dimension_numbers = #tpu.dot_dimension_numbers<[1], [0], [0], [1], [0, 0, 1, 1], [], []>} : vector<16x32xbf16>, vector<32x16xbf16>, vector<16x16xf32> -> vector<16x16xf32>
    %c13_i32_142 = arith.constant 13 : i32
    %222 = tpu.dynamic_rotate %221 by %c13_i32_142 dim 0 : vector<16x16xf32>, i32 -> vector<16x16xf32>
    %c12_i32 = arith.constant 12 : i32
    %223 = vector.broadcast %c12_i32 : i32 to vector<16x16xi32>
    %224 = arith.cmpi sle, %168, %223 : vector<16x16xi32>
    %cst_143 = arith.constant 0.000000e+00 : f32
    %225 = vector.broadcast %cst_143 : f32 to vector<16x16xf32>
    %226 = arith.select %224, %222, %225 : vector<16x16xi1>, vector<16x16xf32>
    %227 = arith.addf %218, %226 : vector<16x16xf32>
    %228 = vector.broadcast %165 : f32 to vector<16x16xf32>
    %229 = arith.addf %227, %228 : vector<16x16xf32>
    %cst_144 = arith.constant 0.000000e+00 : f32
    %230 = vector.broadcast %cst_144 : f32 to vector<16x16xf32>
    %231 = arith.subf %230, %229 : vector<16x16xf32>
    %232 = math.exp %231 : vector<16x16xf32>
    %cst_145 = arith.constant 1.000000e+00 : f32
    %233 = vector.broadcast %cst_145 : f32 to vector<16x16xf32>
    %234 = arith.addf %233, %232 : vector<16x16xf32>
    %235 = tpu.reciprocal %234 {approx = true} : vector<16x16xf32> -> vector<16x16xf32>
    %cst_146 = arith.constant 0.333333343 : f32
    %236 = vector.broadcast %cst_146 : f32 to vector<16x16xf32>
    %237 = arith.mulf %235, %236 : vector<16x16xf32>
    %238 = vector.shape_cast %237 : vector<16x16xf32> to vector<1x16x16xf32>
    %239 = vector.broadcast %238 : vector<1x16x16xf32> to vector<8x16x16xf32>
    %240 = arith.addf %160, %239 : vector<8x16x16xf32>
    %241 = arith.mulf %1, %240 : vector<8x16x16xf32>
    %c0_147 = arith.constant 0 : index
    %c0_148 = arith.constant 0 : index
    %c0_149 = arith.constant 0 : index
    %c0_150 = arith.constant 0 : index
    %242 = vector.load %arg6[%c0_147, %c0_148, %c0_149, %c0_150] : memref<1x8x16x16xf32, #tpu.memory_space<vmem>>, vector<1x8x16x16xf32>
    %243 = vector.shape_cast %242 : vector<1x8x16x16xf32> to vector<8x16x16xf32>
    %244 = vector.shape_cast %241 : vector<8x16x16xf32> to vector<1x8x16x16xf32>
    tpu.vector_store %arg6[%c0_147, %c0_148, %c0_149, %c0_150], %244 {strides = array<i32>} : memref<1x8x16x16xf32, #tpu.memory_space<vmem>>, vector<1x8x16x16xf32>,
    return
  }
  func.func @transform_0(%arg0: i32) -> (i32, i32, i32, i32) {
    %c0_i32 = arith.constant 0 : i32
    %c0_i32_0 = arith.constant 0 : i32
    %c0_i32_1 = arith.constant 0 : i32
    %c0_i32_2 = arith.constant 0 : i32
    return %arg0, %c0_i32, %c0_i32_0, %c0_i32_1 : i32, i32, i32, i32
  }
  func.func @transform_1(%arg0: i32) -> (i32, i32, i32) {
    %c0_i32 = arith.constant 0 : i32
    %c0_i32_0 = arith.constant 0 : i32
    %c0_i32_1 = arith.constant 0 : i32
    %c0_i32_2 = arith.constant 0 : i32
    return %c0_i32, %c0_i32_0, %c0_i32_1 : i32, i32, i32
  }
  func.func @transform_2(%arg0: i32) -> (i32, i32, i32) {
    %c0_i32 = arith.constant 0 : i32
    %c0_i32_0 = arith.constant 0 : i32
    %c0_i32_1 = arith.constant 0 : i32
    %c0_i32_2 = arith.constant 0 : i32
    return %c0_i32, %c0_i32_0, %c0_i32_1 : i32, i32, i32
  }
  func.func @transform_3(%arg0: i32) -> (i32, i32, i32) {
    %c0_i32 = arith.constant 0 : i32
    %c0_i32_0 = arith.constant 0 : i32
    %c0_i32_1 = arith.constant 0 : i32
    %c0_i32_2 = arith.constant 0 : i32
    return %c0_i32, %c0_i32_0, %c0_i32_1 : i32, i32, i32
  }
  func.func @transform_4(%arg0: i32) -> i32 {
    %c0_i32 = arith.constant 0 : i32
    %c0_i32_0 = arith.constant 0 : i32
    return %c0_i32 : i32
  }
  func.func @transform_5(%arg0: i32) -> (i32, i32, i32, i32) {
    %c0_i32 = arith.constant 0 : i32
    %c0_i32_0 = arith.constant 0 : i32
    %c0_i32_1 = arith.constant 0 : i32
    %c0_i32_2 = arith.constant 0 : i32
    return %arg0, %c0_i32, %c0_i32_0, %c0_i32_1 : i32, i32, i32, i32
  }
}

</mosaic_0001>

<llo_original>
// kernel: tpu_custom_call.1
$region0: #{tpu_custom_call.1}
  #allocation0 [shape = 'u32[]', space=smem, size = 0x4, offset = 0x4, fixed_abs, tag = 'smem constant byte address 0x4 - core index']
  #allocation1 [shape = 'u32[72,128]{1,0:T(1,128)}', space=vmem, size = 0x9000, scoped, tag = 'internal scratch']
  %s0 = inlined_call_operand.vmem [shape: f32[2,8,16,16], index: 0, kind: input, shape index: {}]
  %s1 = inlined_call_operand.vmem [shape: bf16[7,32,16], index: 1, kind: input, shape index: {}]
  %s2 = inlined_call_operand.vmem [shape: bf16[7,32,16], index: 2, kind: input, shape index: {}]
  %s3 = inlined_call_operand.vmem [shape: bf16[7,32,16], index: 3, kind: input, shape index: {}]
  %s4 = inlined_call_operand.vmem [shape: f32[3], index: 4, kind: input, shape index: {}]
  %s5 = inlined_call_operand.hbm [shape: f32[2,8,16,16], index: 5, kind: output, shape index: {}]
  %s6 = sld [smem:[#allocation0]]
  $region57: #{tpu_custom_call.1} parent=0
    _
  %s8 = ssub.s32 1, %s6
  %s9 = scalar_select 0, %s8, %s6
  $region1: #{tpu_custom_call.1} parent=0
    #allocation2 [shape = 'u8[512]{0}', space=smem, size = 0x200, scoped, tag = 'input window, operand 4, single buffered']
    #allocation3 [shape = 's32[2]{0}', space=sflag, size = 0x8, scoped, tag = 'scoped memory for tpu_custom_call.1']
    #allocation4 [shape = 's32[2]{0}', space=sflag, size = 0x8, scoped, tag = 'scoped memory for tpu_custom_call.1']
    #allocation5 [shape = 'u8[131072]{0}', space=vmem, size = 0x20000, scoped, tag = 'output window, operand 0']
    %10 = vsyncpa [#allocation4], 0
    %11 = vsyncpa [#allocation3], 0
    %s12 = scalar_lea.sflag [#allocation3], 1
    %13 = vsyncpa %s12, 0
    loop: start=0, step=1, limit=4
    $region2: #{tpu_custom_call.1} parent=1 // loop_pre_header
      _
    $region3: #{tpu_custom_call.1} parent=1 // loop_header
      %s15 = sphi 0, %s19
      %p16 = scmp.ge.s32.totalorder %s15, 4
      %s25 = sphi 0, %s27
      %s28 = sphi 0, %s25
      %s29 = sphi 0, %s28
      %s45 = sphi 0, %s29
      %s49 = sphi 0, %s49
      %s51 = sphi 0, %s49
      %s52 = sphi 0, %s51
      %s66 = sphi 0, %s52
      %s70 = sphi 0, %s70
      %s72 = sphi 0, %s70
      %s73 = sphi 0, %s72
      %s87 = sphi 0, %s73
      %s91 = sphi 0, %s91
      %s93 = sphi 0, %s91
      %s94 = sphi 0, %s93
      %s108 = sphi 0, %s94
      %s112 = sphi 0, %s112
      %s114 = sphi 0, %s112
      %s115 = sphi 0, %s114
      %s129 = sphi 0, %s115
      %s135 = sphi 0, %s137
      %s138 = sphi 0, %s135
      %s139 = sphi 0, %s138
      %s155 = sphi 0, %s139
    $region4: #{tpu_custom_call.1} parent=1 // loop_header_branch
      %18 = sbr.rel (%p16) target = $region8
    $region5: #{tpu_custom_call.1} parent=1 // loop_body
      %s20 = ssub.s32 %s15, 1
      %s21 = ssub.s32 %s15, 2
      %s22 = sadd.s32 %s15, 1
      %s23 = ssub.s32 %s15, %s22
      %p24 = scmp.eq.s32.totalorder %s23, 0
      %s26 = sadd.s32 %s25, 1
      %s27 = scalar_select %p24, %s25, %s26
      %p30 = pneg %p24
      %p31 = scmp.eq.s32.totalorder %s15, 1
      %p32 = por %p30, %p31
      %p33 = scmp.ne.s32.totalorder %s25, %s28
      %p34 = scmp.eq.s32.totalorder %s15, 0
      %p35 = por %p33, %p34
      %p36 = scmp.ne.s32.totalorder %s25, %s28
      %p37 = scmp.eq.s32.totalorder %s20, 1
      %p38 = por %p36, %p37
      %p39 = scmp.ne.s32.totalorder %s28, %s29
      %p40 = scmp.eq.s32.totalorder %s20, 0
      %p41 = por %p39, %p40
      %p42 = scmp.ne.s32.totalorder %s28, %s29
      %p43 = scmp.eq.s32.totalorder %s21, 1
      %p44 = por %p42, %p43
      %p46 = scmp.ne.s32.totalorder %s29, %s45
      %p47 = scmp.eq.s32.totalorder %s21, 0
      %p48 = por %p46, %p47
      %s50 = sadd.s32 %s49, 1
      %p53 = scmp.eq.s32.totalorder %s15, 1
      %p54 = scmp.ne.s32.totalorder %s49, %s51
      %p55 = scmp.eq.s32.totalorder %s15, 0
      %p56 = por %p54, %p55
      %p57 = scmp.ne.s32.totalorder %s49, %s51
      %p58 = scmp.eq.s32.totalorder %s20, 1
      %p59 = por %p57, %p58
      %p60 = scmp.ne.s32.totalorder %s51, %s52
      %p61 = scmp.eq.s32.totalorder %s20, 0
      %p62 = por %p60, %p61
      %p63 = scmp.ne.s32.totalorder %s51, %s52
      %p64 = scmp.eq.s32.totalorder %s21, 1
      %p65 = por %p63, %p64
      %p67 = scmp.ne.s32.totalorder %s52, %s66
      %p68 = scmp.eq.s32.totalorder %s21, 0
      %p69 = por %p67, %p68
      %s71 = sadd.s32 %s70, 1
      %p74 = scmp.eq.s32.totalorder %s15, 1
      %p75 = scmp.ne.s32.totalorder %s70, %s72
      %p76 = scmp.eq.s32.totalorder %s15, 0
      %p77 = por %p75, %p76
      %p78 = scmp.ne.s32.totalorder %s70, %s72
      %p79 = scmp.eq.s32.totalorder %s20, 1
      %p80 = por %p78, %p79
      %p81 = scmp.ne.s32.totalorder %s72, %s73
      %p82 = scmp.eq.s32.totalorder %s20, 0
      %p83 = por %p81, %p82
      %p84 = scmp.ne.s32.totalorder %s72, %s73
      %p85 = scmp.eq.s32.totalorder %s21, 1
      %p86 = por %p84, %p85
      %p88 = scmp.ne.s32.totalorder %s73, %s87
      %p89 = scmp.eq.s32.totalorder %s21, 0
      %p90 = por %p88, %p89
      %s92 = sadd.s32 %s91, 1
      %p95 = scmp.eq.s32.totalorder %s15, 1
      %p96 = scmp.ne.s32.totalorder %s91, %s93
      %p97 = scmp.eq.s32.totalorder %s15, 0
      %p98 = por %p96, %p97
      %p99 = scmp.ne.s32.totalorder %s91, %s93
      %p100 = scmp.eq.s32.totalorder %s20, 1
      %p101 = por %p99, %p100
      %p102 = scmp.ne.s32.totalorder %s93, %s94
      %p103 = scmp.eq.s32.totalorder %s20, 0
      %p104 = por %p102, %p103
      %p105 = scmp.ne.s32.totalorder %s93, %s94
      %p106 = scmp.eq.s32.totalorder %s21, 1
      %p107 = por %p105, %p106
      %p109 = scmp.ne.s32.totalorder %s94, %s108
      %p110 = scmp.eq.s32.totalorder %s21, 0
      %p111 = por %p109, %p110
      %s113 = sadd.s32 %s112, 1
      %p116 = scmp.eq.s32.totalorder %s15, 1
      %p117 = scmp.ne.s32.totalorder %s112, %s114
      %p118 = scmp.eq.s32.totalorder %s15, 0
      %p119 = por %p117, %p118
      %p120 = scmp.ne.s32.totalorder %s112, %s114
      %p121 = scmp.eq.s32.totalorder %s20, 1
      %p122 = por %p120, %p121
      %p123 = scmp.ne.s32.totalorder %s114, %s115
      %p124 = scmp.eq.s32.totalorder %s20, 0
      %p125 = por %p123, %p124
      %p126 = scmp.ne.s32.totalorder %s114, %s115
      %p127 = scmp.eq.s32.totalorder %s21, 1
      %p128 = por %p126, %p127
      %p130 = scmp.ne.s32.totalorder %s115, %s129
      %p131 = scmp.eq.s32.totalorder %s21, 0
      %p132 = por %p130, %p131
      %s133 = ssub.s32 %s15, %s22
      %p134 = scmp.eq.s32.totalorder %s133, 0
      %s136 = sadd.s32 %s135, 1
      %s137 = scalar_select %p134, %s135, %s136
      %p140 = pneg %p134
      %p141 = scmp.eq.s32.totalorder %s15, 1
      %p142 = por %p140, %p141
      %p143 = scmp.ne.s32.totalorder %s135, %s138
      %p144 = scmp.eq.s32.totalorder %s15, 0
      %p145 = por %p143, %p144
      %p146 = scmp.ne.s32.totalorder %s135, %s138
      %p147 = scmp.eq.s32.totalorder %s20, 1
      %p148 = por %p146, %p147
      %p149 = scmp.ne.s32.totalorder %s138, %s139
      %p150 = scmp.eq.s32.totalorder %s20, 0
      %p151 = por %p149, %p150
      %p152 = scmp.ne.s32.totalorder %s138, %s139
      %p153 = scmp.eq.s32.totalorder %s21, 1
      %p154 = por %p152, %p153
      %p156 = scmp.ne.s32.totalorder %s139, %s155
      %p157 = scmp.eq.s32.totalorder %s21, 0
      %p158 = por %p156, %p157
      %p159 = scmp.le.s32.totalorder 1, %s15
      %p160 = scmp.lt.s32.totalorder %s15, 3
      %p161 = pnand %p159, %p160
      %p162 = pneg %p161
      // Predicated region
      $region9: #{tpu_custom_call.1} parent=5 // pred_check
        _
      $region10: #{tpu_custom_call.1} parent=5 // pred_check_branch
        %164 = sbr.rel (%p161) target = $region12
      $region11: #{tpu_custom_call.1} parent=5 // pred_region
        %s165 = ssub.s32 %s15, 1
        // Predicated region
        $region13: #{tpu_custom_call.1} parent=11 // pred_check
          %p166 = pneg %p62
        $region14: #{tpu_custom_call.1} parent=11 // pred_check_branch
          %168 = sbr.rel (%p166) target = $region16
        $region15: #{tpu_custom_call.1} parent=11 // pred_region
          _
        $region16: #{tpu_custom_call.1} parent=11 // pred_fallthru
          _
        // Predicated region
        $region17: #{tpu_custom_call.1} parent=11 // pred_check
          %p169 = pneg %p83
        $region18: #{tpu_custom_call.1} parent=11 // pred_check_branch
          %171 = sbr.rel (%p169) target = $region20
        $region19: #{tpu_custom_call.1} parent=11 // pred_region
          _
        $region20: #{tpu_custom_call.1} parent=11 // pred_fallthru
          _
        // Predicated region
        $region21: #{tpu_custom_call.1} parent=11 // pred_check
          %p172 = pneg %p104
        $region22: #{tpu_custom_call.1} parent=11 // pred_check_branch
          %174 = sbr.rel (%p172) target = $region24
        $region23: #{tpu_custom_call.1} parent=11 // pred_region
          _
        $region24: #{tpu_custom_call.1} parent=11 // pred_fallthru
          _
        // Predicated region
        $region25: #{tpu_custom_call.1} parent=11 // pred_check
          %p175 = pneg %p125
        $region26: #{tpu_custom_call.1} parent=11 // pred_check_branch
          %177 = sbr.rel (%p175) target = $region28
        $region27: #{tpu_custom_call.1} parent=11 // pred_region
          %179 = vsyncadd [#allocation4], 0
          %s181 = sshll.u32 %s4, 4
          %s182 = int_to_ptr.vmem [resolvable:$true] %s181
          %184 = dma.vmem_to_smem %s182, 16, [#allocation2], [#allocation4]
        $region28: #{tpu_custom_call.1} parent=11 // pred_fallthru
          _
      $region12: #{tpu_custom_call.1} parent=5 // pred_fallthru
        _
      %p185 = scmp.lt.s32.totalorder %s15, 2
      // Predicated region
      $region29: #{tpu_custom_call.1} parent=5 // pred_check
        %p186 = pneg %p185
      $region30: #{tpu_custom_call.1} parent=5 // pred_check_branch
        %188 = sbr.rel (%p186) target = $region32
      $region31: #{tpu_custom_call.1} parent=5 // pred_region
        // Predicated region
        $region33: #{tpu_custom_call.1} parent=31 // pred_check
          %p189 = pneg %p35
        $region34: #{tpu_custom_call.1} parent=31 // pred_check_branch
          %191 = sbr.rel (%p189) target = $region36
        $region35: #{tpu_custom_call.1} parent=31 // pred_region
          %p192 = scmp.lt.s32.totalorder %s15, 1
          %s193 = scalar_select %p192, %s15, 1
          %s194 = smul.addr %s193, 16
          %s195 = smul.addr %s194, 8
          %s196 = scalar_lea.vmem %s0, %s195
        $region36: #{tpu_custom_call.1} parent=31 // pred_fallthru
          _
      $region32: #{tpu_custom_call.1} parent=5 // pred_fallthru
        _
      %p197 = scmp.le.s32.totalorder 1, %s15
      %p198 = scmp.lt.s32.totalorder %s15, 3
      %p199 = pnand %p197, %p198
      %p200 = pneg %p199
      // Predicated region
      $region37: #{tpu_custom_call.1} parent=5 // pred_check
        _
      $region38: #{tpu_custom_call.1} parent=5 // pred_check_branch
        %202 = sbr.rel (%p199) target = $region40
      $region39: #{tpu_custom_call.1} parent=5 // pred_region
        %s203 = ssub.s32 %s15, 1
        // Predicated region
        $region41: #{tpu_custom_call.1} parent=39 // pred_check
          %p204 = pneg %p125
        $region42: #{tpu_custom_call.1} parent=39 // pred_check_branch
          %206 = sbr.rel (%p204) target = $region44
        $region43: #{tpu_custom_call.1} parent=39 // pred_region
          %208 = dma.done [#allocation4], 16
        $region44: #{tpu_custom_call.1} parent=39 // pred_fallthru
          _
        %209 = sfence
        %p210 = scmp.lt.s32.totalorder %s20, 1
        %s211 = scalar_select %p210, %s20, 1
        %s212 = smul.addr %s211, 16
        %s213 = smul.addr %s212, 8
        %s214 = scalar_lea.vmem %s0, %s213
        %p215 = pneg %p41
        %p216 = pneg %p38
        %p217 = pneg %p62
        %p218 = pneg %p59
        %p219 = pneg %p83
        %p220 = pneg %p80
        %p221 = pneg %p104
        %p222 = pneg %p101
        %p223 = pneg %p125
        %p224 = pneg %p122
        %p225 = pneg %p151
        %p226 = pneg %p148
        %s227 = sand.u32 %s138, 1
        %s228 = scalar_lea.sflag [#allocation3], %s227
        %s229 = sand.u32 %s138, 1
        %s230 = smul.addr %s229, 128
        %s231 = scalar_lea.vmem [#allocation5], %s230
        %p232 = scmp.lt.s32.totalorder %s20, 1
        %s233 = scalar_select %p232, %s20, 1
        %s234 = smul.addr %s233, 16
        %s235 = smul.addr %s234, 8
        %s236 = scalar_lea.vmem %s0, %s235
        %v238 = vld [vmem:[%s236] sm:$0xff]
        %v239 = vld [vmem:[%s236 + $0x8] sm:$0xff]
        %v240 = vld [vmem:[%s236 + $0x10] sm:$0xff]
        %v241 = vld [vmem:[%s236 + $0x18] sm:$0xff]
        %v242 = vld [vmem:[%s236 + $0x20] sm:$0xff]
        %v243 = vld [vmem:[%s236 + $0x28] sm:$0xff]
        %v244 = vld [vmem:[%s236 + $0x30] sm:$0xff]
        %v245 = vld [vmem:[%s236 + $0x38] sm:$0xff]
        %v246 = vld [vmem:[%s236 + $0x40] sm:$0xff]
        %v247 = vld [vmem:[%s236 + $0x48] sm:$0xff]
        %v248 = vld [vmem:[%s236 + $0x50] sm:$0xff]
        %v249 = vld [vmem:[%s236 + $0x58] sm:$0xff]
        %v250 = vld [vmem:[%s236 + $0x60] sm:$0xff]
        %v251 = vld [vmem:[%s236 + $0x68] sm:$0xff]
        %v252 = vld [vmem:[%s236 + $0x70] sm:$0xff]
        %v253 = vld [vmem:[%s236 + $0x78] sm:$0xff]
        %vm254 = vcmask 130048
        %v255 = vsel %vm254, %v238, -inf
        %v256 = vsel %vm254, %v239, -inf
        %v257 = vmax.f32 %v255, %v256
        %v258 = vrot.slane %v257, 4
        %v259 = vmax.f32 %v257, %v258
        %v260 = vrot.slane %v259, 2
        %v261 = vmax.f32 %v259, %v260
        %v262 = vrot.slane %v261, 1
        %v263 = vmax.f32 %v261, %v262
        %v264 = vsel %vm254, %v240, -inf
        %v265 = vsel %vm254, %v241, -inf
        %v266 = vmax.f32 %v264, %v265
        %v267 = vrot.slane %v266, 4
        %v268 = vmax.f32 %v266, %v267
        %v269 = vrot.slane %v268, 2
        %v270 = vmax.f32 %v268, %v269
        %v271 = vrot.slane %v270, 1
        %v272 = vmax.f32 %v270, %v271
        %v273 = vsel %vm254, %v242, -inf
        %v274 = vsel %vm254, %v243, -inf
        %v275 = vmax.f32 %v273, %v274
        %v276 = vrot.slane %v275, 4
        %v277 = vmax.f32 %v275, %v276
        %v278 = vrot.slane %v277, 2
        %v279 = vmax.f32 %v277, %v278
        %v280 = vrot.slane %v279, 1
        %v281 = vmax.f32 %v279, %v280
        %v282 = vsel %vm254, %v244, -inf
        %v283 = vsel %vm254, %v245, -inf
        %v284 = vmax.f32 %v282, %v283
        %v285 = vrot.slane %v284, 4
        %v286 = vmax.f32 %v284, %v285
        %v287 = vrot.slane %v286, 2
        %v288 = vmax.f32 %v286, %v287
        %v289 = vrot.slane %v288, 1
        %v290 = vmax.f32 %v288, %v289
        %v291 = vsel %vm254, %v246, -inf
        %v292 = vsel %vm254, %v247, -inf
        %v293 = vmax.f32 %v291, %v292
        %v294 = vrot.slane %v293, 4
        %v295 = vmax.f32 %v293, %v294
        %v296 = vrot.slane %v295, 2
        %v297 = vmax.f32 %v295, %v296
        %v298 = vrot.slane %v297, 1
        %v299 = vmax.f32 %v297, %v298
        %v300 = vsel %vm254, %v248, -inf
        %v301 = vsel %vm254, %v249, -inf
        %v302 = vmax.f32 %v300, %v301
        %v303 = vrot.slane %v302, 4
        %v304 = vmax.f32 %v302, %v303
        %v305 = vrot.slane %v304, 2
        %v306 = vmax.f32 %v304, %v305
        %v307 = vrot.slane %v306, 1
        %v308 = vmax.f32 %v306, %v307
        %v309 = vsel %vm254, %v250, -inf
        %v310 = vsel %vm254, %v251, -inf
        %v311 = vmax.f32 %v309, %v310
        %v312 = vrot.slane %v311, 4
        %v313 = vmax.f32 %v311, %v312
        %v314 = vrot.slane %v313, 2
        %v315 = vmax.f32 %v313, %v314
        %v316 = vrot.slane %v315, 1
        %v317 = vmax.f32 %v315, %v316
        %v318 = vsel %vm254, %v252, -inf
        %v319 = vsel %vm254, %v253, -inf
        %v320 = vmax.f32 %v318, %v319
        %v321 = vrot.slane %v320, 4
        %v322 = vmax.f32 %v320, %v321
        %v323 = vrot.slane %v322, 2
        %v324 = vmax.f32 %v322, %v323
        %v325 = vrot.slane %v324, 1
        %v326 = vmax.f32 %v324, %v325
        %v327 = vsel %vm254, %v238, 0.0
        %v328 = vsel %vm254, %v239, 0.0
        %v329 = vadd.f32 %v327, %v328
        %v330 = vrot.slane %v329, 4
        %v331 = vadd.f32 %v329, %v330
        %v332 = vrot.slane %v331, 2
        %v333 = vadd.f32 %v331, %v332
        %v334 = vrot.slane %v333, 1
        %v335 = vadd.f32 %v333, %v334
        %v336 = vsel %vm254, %v240, 0.0
        %v337 = vsel %vm254, %v241, 0.0
        %v338 = vadd.f32 %v336, %v337
        %v339 = vrot.slane %v338, 4
        %v340 = vadd.f32 %v338, %v339
        %v341 = vrot.slane %v340, 2
        %v342 = vadd.f32 %v340, %v341
        %v343 = vrot.slane %v342, 1
        %v344 = vadd.f32 %v342, %v343
        %v345 = vsel %vm254, %v242, 0.0
        %v346 = vsel %vm254, %v243, 0.0
        %v347 = vadd.f32 %v345, %v346
        %v348 = vrot.slane %v347, 4
        %v349 = vadd.f32 %v347, %v348
        %v350 = vrot.slane %v349, 2
        %v351 = vadd.f32 %v349, %v350
        %v352 = vrot.slane %v351, 1
        %v353 = vadd.f32 %v351, %v352
        %v354 = vsel %vm254, %v244, 0.0
        %v355 = vsel %vm254, %v245, 0.0
        %v356 = vadd.f32 %v354, %v355
        %v357 = vrot.slane %v356, 4
        %v358 = vadd.f32 %v356, %v357
        %v359 = vrot.slane %v358, 2
        %v360 = vadd.f32 %v358, %v359
        %v361 = vrot.slane %v360, 1
        %v362 = vadd.f32 %v360, %v361
        %v363 = vsel %vm254, %v246, 0.0
        %v364 = vsel %vm254, %v247, 0.0
        %v365 = vadd.f32 %v363, %v364
        %v366 = vrot.slane %v365, 4
        %v367 = vadd.f32 %v365, %v366
        %v368 = vrot.slane %v367, 2
        %v369 = vadd.f32 %v367, %v368
        %v370 = vrot.slane %v369, 1
        %v371 = vadd.f32 %v369, %v370
        %v372 = vsel %vm254, %v248, 0.0
        %v373 = vsel %vm254, %v249, 0.0
        %v374 = vadd.f32 %v372, %v373
        %v375 = vrot.slane %v374, 4
        %v376 = vadd.f32 %v374, %v375
        %v377 = vrot.slane %v376, 2
        %v378 = vadd.f32 %v376, %v377
        %v379 = vrot.slane %v378, 1
        %v380 = vadd.f32 %v378, %v379
        %v381 = vsel %vm254, %v250, 0.0
        %v382 = vsel %vm254, %v251, 0.0
        %v383 = vadd.f32 %v381, %v382
        %v384 = vrot.slane %v383, 4
        %v385 = vadd.f32 %v383, %v384
        %v386 = vrot.slane %v385, 2
        %v387 = vadd.f32 %v385, %v386
        %v388 = vrot.slane %v387, 1
        %v389 = vadd.f32 %v387, %v388
        %v390 = vsel %vm254, %v252, 0.0
        %v391 = vsel %vm254, %v253, 0.0
        %v392 = vadd.f32 %v390, %v391
        %v393 = vrot.slane %v392, 4
        %v394 = vadd.f32 %v392, %v393
        %v395 = vrot.slane %v394, 2
        %v396 = vadd.f32 %v394, %v395
        %v397 = vrot.slane %v396, 1
        %v398 = vadd.f32 %v396, %v397
        %v399 = vrcp.pop 16.0
        %v400 = vmul.f32 16.0, %v399
        %v401 = vsub.f32 1.0, %v400
        %v402 = vmul.f32 %v399, %v401
        %v403 = vadd.f32 %v399, %v402
        %vm404 = vweird.f32 %v399
        %v405 = vsel %vm404, %v399, %v403
        %v406 = vmul.f32 %v335, %v405
        %v407 = vmul.f32 %v344, %v405
        %v408 = vmul.f32 %v353, %v405
        %v409 = vmul.f32 %v362, %v405
        %v410 = vmul.f32 %v371, %v405
        %v411 = vmul.f32 %v380, %v405
        %v412 = vmul.f32 %v389, %v405
        %v413 = vmul.f32 %v398, %v405
        %s414 = sld [smem:[#allocation2 + $0x1]]
        %vm423 = vcmask 1041409
        %v424 = vsel %vm423, %v272, %v263
        %vm425 = vcmask 1042434
        %v426 = vsel %vm425, %v281, %v424
        %vm427 = vcmask 1043459
        %v428 = vsel %vm427, %v290, %v426
        %vm429 = vcmask 1044484
        %v430 = vsel %vm429, %v299, %v428
        %vm431 = vcmask 1045509
        %v432 = vsel %vm431, %v308, %v430
        %vm433 = vcmask 1046534
        %v434 = vsel %vm433, %v317, %v432
        %vm435 = vcmask 1047559
        %v436 = vsel %vm435, %v326, %v434
        %v446 = vsel %vm423, %v407, %v406
        %v447 = vsel %vm425, %v408, %v446
        %v448 = vsel %vm427, %v409, %v447
        %v449 = vsel %vm429, %v410, %v448
        %v450 = vsel %vm431, %v411, %v449
        %v451 = vsel %vm433, %v412, %v450
        %v452 = vsel %vm435, %v413, %v451
        %453 = vrot.lane.b32.xlu0 %v452, 16
        %v454 = vpop.permute.xlu0 %453
        %v456 = vsel %vm254, %v436, %v454
        %v457 = vpack.c.bf16 %v456, %v456
        %v458 = vlaneseq
        %v459 = vshrl.u32 %v458, 7
        %v460 = vld [vmem:[%s1] sm:$0xf]
        %v461 = vld [vmem:[%s1 + $0x4] sm:$0xf]
        %v462 = vld [vmem:[%s1 + $0x8] sm:$0xf]
        %v463 = vld [vmem:[%s1 + $0xc] sm:$0xf]
        %v468 = vunpack.c.l.b16 %v460
        %v469 = vunpack.c.l.b16 %v461
        %v470 = vunpack.c.l.b16 %v462
        %v471 = vunpack.c.l.b16 %v463
        %v472 = vpack.c.b16 %v469, %v468
        %v473 = vpack.c.b16 %v471, %v470
        %vm476 = vcmask 261120
        %v478 = vsel %vm476, %v457, 0
        %480 = vmatpush.bf16.msra.mxu0 0
        %481 = vmatpush.bf16.msra.mxu0 0
        %482 = vmatpush.bf16.msra.mxu0 0
        %483 = vmatpush.bf16.msra.mxu0 0
        %484 = vmatpush.bf16.msra.mxu0 0
        %485 = vmatpush.bf16.msra.mxu0 0
        %486 = vmatpush.bf16.msra.mxu0 %v473
        %487 = vmatpush.bf16.msra.mxu0 %v472
        %488 = vmatmul.bf16.gmra.mxu0 %v478
        %v489 = vpop.f32.mrf.mxu0
        %v490 = vadd.f32 0.0, %v489
        %v491 = vpop.f32.mrf.mxu0
        %492 = vdwg.mxu0
        %v493 = vrot.slane %v490, 5
        %vm494 = vcmp.ge.s32.totalorder %v459, 3
        %v495 = vsel %vm494, %v493, 0.0
        %v496 = vadd.f32 %v495, 0.0
        %s497 = scalar_lea.vmem %s1, 16
        %v498 = vld [vmem:[%s497] sm:$0xf]
        %v499 = vld [vmem:[%s497 + $0x4] sm:$0xf]
        %v500 = vld [vmem:[%s497 + $0x8] sm:$0xf]
        %v501 = vld [vmem:[%s497 + $0xc] sm:$0xf]
        %v506 = vunpack.c.l.b16 %v498
        %v507 = vunpack.c.l.b16 %v499
        %v508 = vunpack.c.l.b16 %v500
        %v509 = vunpack.c.l.b16 %v501
        %v510 = vpack.c.b16 %v507, %v506
        %v511 = vpack.c.b16 %v509, %v508
        %514 = vmatpush.bf16.msra.mxu0 0
        %515 = vmatpush.bf16.msra.mxu0 0
        %516 = vmatpush.bf16.msra.mxu0 0
        %517 = vmatpush.bf16.msra.mxu0 0
        %518 = vmatpush.bf16.msra.mxu0 0
        %519 = vmatpush.bf16.msra.mxu0 0
        %520 = vmatpush.bf16.msra.mxu0 %v511
        %521 = vmatpush.bf16.msra.mxu0 %v510
        %522 = vmatmul.bf16.gmra.mxu0 %v478
        %v523 = vpop.f32.mrf.mxu0
        %v524 = vadd.f32 0.0, %v523
        %v525 = vpop.f32.mrf.mxu0
        %526 = vdwg.mxu0
        %v527 = vrot.slane %v524, 6
        %vm528 = vcmp.ge.s32.totalorder %v459, 2
        %v529 = vsel %vm528, %v527, 0.0
        %v530 = vadd.f32 %v496, %v529
        %s531 = scalar_lea.vmem %s1, 32
        %v532 = vld [vmem:[%s531] sm:$0xf]
        %v533 = vld [vmem:[%s531 + $0x4] sm:$0xf]
        %v534 = vld [vmem:[%s531 + $0x8] sm:$0xf]
        %v535 = vld [vmem:[%s531 + $0xc] sm:$0xf]
        %v540 = vunpack.c.l.b16 %v532
        %v541 = vunpack.c.l.b16 %v533
        %v542 = vunpack.c.l.b16 %v534
        %v543 = vunpack.c.l.b16 %v535
        %v544 = vpack.c.b16 %v541, %v540
        %v545 = vpack.c.b16 %v543, %v542
        %548 = vmatpush.bf16.msra.mxu0 0
        %549 = vmatpush.bf16.msra.mxu0 0
        %550 = vmatpush.bf16.msra.mxu0 0
        %551 = vmatpush.bf16.msra.mxu0 0
        %552 = vmatpush.bf16.msra.mxu0 0
        %553 = vmatpush.bf16.msra.mxu0 0
        %554 = vmatpush.bf16.msra.mxu0 %v545
        %555 = vmatpush.bf16.msra.mxu0 %v544
        %556 = vmatmul.bf16.gmra.mxu0 %v478
        %v557 = vpop.f32.mrf.mxu0
        %v558 = vadd.f32 0.0, %v557
        %v559 = vpop.f32.mrf.mxu0
        %560 = vdwg.mxu0
        %v561 = vrot.slane %v558, 7
        %vm562 = vcmp.ge.s32.totalorder %v459, 1
        %v563 = vsel %vm562, %v561, 0.0
        %v564 = vadd.f32 %v530, %v563
        %s565 = scalar_lea.vmem %s1, 48
        %v566 = vld [vmem:[%s565] sm:$0xf]
        %v567 = vld [vmem:[%s565 + $0x4] sm:$0xf]
        %v568 = vld [vmem:[%s565 + $0x8] sm:$0xf]
        %v569 = vld [vmem:[%s565 + $0xc] sm:$0xf]
        %v574 = vunpack.c.l.b16 %v566
        %v575 = vunpack.c.l.b16 %v567
        %v576 = vunpack.c.l.b16 %v568
        %v577 = vunpack.c.l.b16 %v569
        %v578 = vpack.c.b16 %v575, %v574
        %v579 = vpack.c.b16 %v577, %v576
        %582 = vmatpush.bf16.msra.mxu0 0
        %583 = vmatpush.bf16.msra.mxu0 0
        %584 = vmatpush.bf16.msra.mxu0 0
        %585 = vmatpush.bf16.msra.mxu0 0
        %586 = vmatpush.bf16.msra.mxu0 0
        %587 = vmatpush.bf16.msra.mxu0 0
        %588 = vmatpush.bf16.msra.mxu0 %v579
        %589 = vmatpush.bf16.msra.mxu0 %v578
        %590 = vmatmul.bf16.gmra.mxu0 %v478
        %v591 = vpop.f32.mrf.mxu0
        %v592 = vadd.f32 0.0, %v591
        %v593 = vpop.f32.mrf.mxu0
        %594 = vdwg.mxu0
        %v595 = vadd.f32 %v564, %v592
        %s596 = scalar_lea.vmem %s1, 64
        %v597 = vld [vmem:[%s596] sm:$0xf]
        %v598 = vld [vmem:[%s596 + $0x4] sm:$0xf]
        %v599 = vld [vmem:[%s596 + $0x8] sm:$0xf]
        %v600 = vld [vmem:[%s596 + $0xc] sm:$0xf]
        %v605 = vunpack.c.l.b16 %v597
        %v606 = vunpack.c.l.b16 %v598
        %v607 = vunpack.c.l.b16 %v599
        %v608 = vunpack.c.l.b16 %v600
        %v609 = vpack.c.b16 %v606, %v605
        %v610 = vpack.c.b16 %v608, %v607
        %613 = vmatpush.bf16.msra.mxu0 0
        %614 = vmatpush.bf16.msra.mxu0 0
        %615 = vmatpush.bf16.msra.mxu0 0
        %616 = vmatpush.bf16.msra.mxu0 0
        %617 = vmatpush.bf16.msra.mxu0 0
        %618 = vmatpush.bf16.msra.mxu0 0
        %619 = vmatpush.bf16.msra.mxu0 %v610
        %620 = vmatpush.bf16.msra.mxu0 %v609
        %621 = vmatmul.bf16.gmra.mxu0 %v478
        %v622 = vpop.f32.mrf.mxu0
        %v623 = vadd.f32 0.0, %v622
        %v624 = vpop.f32.mrf.mxu0
        %625 = vdwg.mxu0
        %v626 = vrot.slane %v623, 1
        %vm627 = vcmp.le.s32.totalorder %v459, 6
        %v628 = vsel %vm627, %v626, 0.0
        %v629 = vadd.f32 %v595, %v628
        %s630 = scalar_lea.vmem %s1, 80
        %v631 = vld [vmem:[%s630] sm:$0xf]
        %v632 = vld [vmem:[%s630 + $0x4] sm:$0xf]
        %v633 = vld [vmem:[%s630 + $0x8] sm:$0xf]
        %v634 = vld [vmem:[%s630 + $0xc] sm:$0xf]
        %v639 = vunpack.c.l.b16 %v631
        %v640 = vunpack.c.l.b16 %v632
        %v641 = vunpack.c.l.b16 %v633
        %v642 = vunpack.c.l.b16 %v634
        %v643 = vpack.c.b16 %v640, %v639
        %v644 = vpack.c.b16 %v642, %v641
        %647 = vmatpush.bf16.msra.mxu0 0
        %648 = vmatpush.bf16.msra.mxu0 0
        %649 = vmatpush.bf16.msra.mxu0 0
        %650 = vmatpush.bf16.msra.mxu0 0
        %651 = vmatpush.bf16.msra.mxu0 0
        %652 = vmatpush.bf16.msra.mxu0 0
        %653 = vmatpush.bf16.msra.mxu0 %v644
        %654 = vmatpush.bf16.msra.mxu0 %v643
        %655 = vmatmul.bf16.gmra.mxu0 %v478
        %v656 = vpop.f32.mrf.mxu0
        %v657 = vadd.f32 0.0, %v656
        %v658 = vpop.f32.mrf.mxu0
        %659 = vdwg.mxu0
        %v660 = vrot.slane %v657, 2
        %vm661 = vcmp.le.s32.totalorder %v459, 5
        %v662 = vsel %vm661, %v660, 0.0
        %v663 = vadd.f32 %v629, %v662
        %s664 = scalar_lea.vmem %s1, 96
        %v665 = vld [vmem:[%s664] sm:$0xf]
        %v666 = vld [vmem:[%s664 + $0x4] sm:$0xf]
        %v667 = vld [vmem:[%s664 + $0x8] sm:$0xf]
        %v668 = vld [vmem:[%s664 + $0xc] sm:$0xf]
        %v673 = vunpack.c.l.b16 %v665
        %v674 = vunpack.c.l.b16 %v666
        %v675 = vunpack.c.l.b16 %v667
        %v676 = vunpack.c.l.b16 %v668
        %v677 = vpack.c.b16 %v674, %v673
        %v678 = vpack.c.b16 %v676, %v675
        %681 = vmatpush.bf16.msra.mxu0 0
        %682 = vmatpush.bf16.msra.mxu0 0
        %683 = vmatpush.bf16.msra.mxu0 0
        %684 = vmatpush.bf16.msra.mxu0 0
        %685 = vmatpush.bf16.msra.mxu0 0
        %686 = vmatpush.bf16.msra.mxu0 0
        %687 = vmatpush.bf16.msra.mxu0 %v678
        %688 = vmatpush.bf16.msra.mxu0 %v677
        %689 = vmatmul.bf16.gmra.mxu0 %v478
        %v690 = vpop.f32.mrf.mxu0
        %v691 = vadd.f32 0.0, %v690
        %v692 = vpop.f32.mrf.mxu0
        %693 = vdwg.mxu0
        %v694 = vrot.slane %v691, 3
        %vm695 = vcmp.le.s32.totalorder %v459, 4
        %v696 = vsel %vm695, %v694, 0.0
        %v697 = vadd.f32 %v663, %v696
        %v698 = vstv %s414
        %v699 = vadd.f32 %v697, %v698
        %v700 = vsub.f32 0.0, %v699
        %v701 = vmul.f32 %v700, 1.442695
        %v702 = vpow.pop %v701
        %v703 = vadd.f32 %v702, 1.0
        %v704 = vrcp.pop %v703
        %v705 = vmul.f32 %v704, 0.33333334
        %706 = vmax.xlane.f32.xlu0 %v255
        %v707 = vpop.xlane.xlu0 %706
        %708 = vmax.xlane.f32.xlu0 %v256
        %v709 = vpop.xlane.xlu0 %708
        %710 = vmax.xlane.f32.xlu0 %v264
        %v711 = vpop.xlane.xlu0 %710
        %712 = vmax.xlane.f32.xlu0 %v265
        %v713 = vpop.xlane.xlu0 %712
        %714 = vmax.xlane.f32.xlu0 %v273
        %v715 = vpop.xlane.xlu0 %714
        %716 = vmax.xlane.f32.xlu0 %v274
        %v717 = vpop.xlane.xlu0 %716
        %718 = vmax.xlane.f32.xlu0 %v282
        %v719 = vpop.xlane.xlu0 %718
        %720 = vmax.xlane.f32.xlu0 %v283
        %v721 = vpop.xlane.xlu0 %720
        %722 = vmax.xlane.f32.xlu0 %v291
        %v723 = vpop.xlane.xlu0 %722
        %724 = vmax.xlane.f32.xlu0 %v292
        %v725 = vpop.xlane.xlu0 %724
        %726 = vmax.xlane.f32.xlu0 %v300
        %v727 = vpop.xlane.xlu0 %726
        %728 = vmax.xlane.f32.xlu0 %v301
        %v729 = vpop.xlane.xlu0 %728
        %730 = vmax.xlane.f32.xlu0 %v309
        %v731 = vpop.xlane.xlu0 %730
        %732 = vmax.xlane.f32.xlu0 %v310
        %v733 = vpop.xlane.xlu0 %732
        %734 = vmax.xlane.f32.xlu0 %v318
        %v735 = vpop.xlane.xlu0 %734
        %736 = vmax.xlane.f32.xlu0 %v319
        %v737 = vpop.xlane.xlu0 %736
        %738 = vadd.xlane.f32.xlu0 %v327
        %v739 = vpop.xlane.xlu0 %738
        %740 = vadd.xlane.f32.xlu0 %v328
        %v741 = vpop.xlane.xlu0 %740
        %742 = vadd.xlane.f32.xlu0 %v336
        %v743 = vpop.xlane.xlu0 %742
        %744 = vadd.xlane.f32.xlu0 %v337
        %v745 = vpop.xlane.xlu0 %744
        %746 = vadd.xlane.f32.xlu0 %v345
        %v747 = vpop.xlane.xlu0 %746
        %748 = vadd.xlane.f32.xlu0 %v346
        %v749 = vpop.xlane.xlu0 %748
        %750 = vadd.xlane.f32.xlu0 %v354
        %v751 = vpop.xlane.xlu0 %750
        %752 = vadd.xlane.f32.xlu0 %v355
        %v753 = vpop.xlane.xlu0 %752
        %754 = vadd.xlane.f32.xlu0 %v363
        %v755 = vpop.xlane.xlu0 %754
        %756 = vadd.xlane.f32.xlu0 %v364
        %v757 = vpop.xlane.xlu0 %756
        %758 = vadd.xlane.f32.xlu0 %v372
        %v759 = vpop.xlane.xlu0 %758
        %760 = vadd.xlane.f32.xlu0 %v373
        %v761 = vpop.xlane.xlu0 %760
        %762 = vadd.xlane.f32.xlu0 %v381
        %v763 = vpop.xlane.xlu0 %762
        %764 = vadd.xlane.f32.xlu0 %v382
        %v765 = vpop.xlane.xlu0 %764
        %766 = vadd.xlane.f32.xlu0 %v390
        %v767 = vpop.xlane.xlu0 %766
        %768 = vadd.xlane.f32.xlu0 %v391
        %v769 = vpop.xlane.xlu0 %768
        %v770 = vmul.f32 %v739, %v405
        %v771 = vmul.f32 %v741, %v405
        %v772 = vmul.f32 %v743, %v405
        %v773 = vmul.f32 %v745, %v405
        %v774 = vmul.f32 %v747, %v405
        %v775 = vmul.f32 %v749, %v405
        %v776 = vmul.f32 %v751, %v405
        %v777 = vmul.f32 %v753, %v405
        %v778 = vmul.f32 %v755, %v405
        %v779 = vmul.f32 %v757, %v405
        %v780 = vmul.f32 %v759, %v405
        %v781 = vmul.f32 %v761, %v405
        %v782 = vmul.f32 %v763, %v405
        %v783 = vmul.f32 %v765, %v405
        %v784 = vmul.f32 %v767, %v405
        %v785 = vmul.f32 %v769, %v405
        %s786 = sld [smem:[#allocation2 + $0x2]]
        %v803 = vlaneseq
        %v804 = vand.u32 %v803, 127
        %v805 = vperm.slane %v707, %v804
        %v806 = vadd.s32 %v804, 4294967288
        %v807 = vperm.slane %v709, %v806
        %vm808 = vcmask 130112
        %v809 = vsel %vm808, %v807, %v805
        %v810 = vperm.slane %v711, %v804
        %v811 = vperm.slane %v713, %v806
        %v812 = vsel %vm808, %v811, %v810
        %v813 = vperm.slane %v715, %v804
        %v814 = vperm.slane %v717, %v806
        %v815 = vsel %vm808, %v814, %v813
        %v816 = vperm.slane %v719, %v804
        %v817 = vperm.slane %v721, %v806
        %v818 = vsel %vm808, %v817, %v816
        %v819 = vperm.slane %v723, %v804
        %v820 = vperm.slane %v725, %v806
        %v821 = vsel %vm808, %v820, %v819
        %v822 = vperm.slane %v727, %v804
        %v823 = vperm.slane %v729, %v806
        %v824 = vsel %vm808, %v823, %v822
        %v825 = vperm.slane %v731, %v804
        %v826 = vperm.slane %v733, %v806
        %v827 = vsel %vm808, %v826, %v825
        %v828 = vperm.slane %v735, %v804
        %v829 = vperm.slane %v737, %v806
        %v830 = vsel %vm808, %v829, %v828
        %v831 = vsel %vm423, %v812, %v809
        %v832 = vsel %vm425, %v815, %v831
        %v833 = vsel %vm427, %v818, %v832
        %v834 = vsel %vm429, %v821, %v833
        %v835 = vsel %vm431, %v824, %v834
        %v836 = vsel %vm433, %v827, %v835
        %v837 = vsel %vm435, %v830, %v836
        %v855 = vadd.s32 %v804, 4294967280
        %v856 = vperm.slane %v770, %v855
        %v857 = vadd.s32 %v804, 4294967272
        %v858 = vperm.slane %v771, %v857
        %vm859 = vcmask 261312
        %v860 = vsel %vm859, %v858, %v856
        %v861 = vperm.slane %v772, %v855
        %v862 = vperm.slane %v773, %v857
        %v863 = vsel %vm859, %v862, %v861
        %v864 = vperm.slane %v774, %v855
        %v865 = vperm.slane %v775, %v857
        %v866 = vsel %vm859, %v865, %v864
        %v867 = vperm.slane %v776, %v855
        %v868 = vperm.slane %v777, %v857
        %v869 = vsel %vm859, %v868, %v867
        %v870 = vperm.slane %v778, %v855
        %v871 = vperm.slane %v779, %v857
        %v872 = vsel %vm859, %v871, %v870
        %v873 = vperm.slane %v780, %v855
        %v874 = vperm.slane %v781, %v857
        %v875 = vsel %vm859, %v874, %v873
        %v876 = vperm.slane %v782, %v855
        %v877 = vperm.slane %v783, %v857
        %v878 = vsel %vm859, %v877, %v876
        %v879 = vperm.slane %v784, %v855
        %v880 = vperm.slane %v785, %v857
        %v881 = vsel %vm859, %v880, %v879
        %v882 = vsel %vm423, %v863, %v860
        %v883 = vsel %vm425, %v866, %v882
        %v884 = vsel %vm427, %v869, %v883
        %v885 = vsel %vm429, %v872, %v884
        %v886 = vsel %vm431, %v875, %v885
        %v887 = vsel %vm433, %v878, %v886
        %v888 = vsel %vm435, %v881, %v887
        %v890 = vsel %vm254, %v837, %v888
        %v891 = vpack.c.bf16 %v890, %v890
        %v892 = vld [vmem:[%s2] sm:$0xf]
        %v893 = vld [vmem:[%s2 + $0x4] sm:$0xf]
        %v894 = vld [vmem:[%s2 + $0x8] sm:$0xf]
        %v895 = vld [vmem:[%s2 + $0xc] sm:$0xf]
        %v900 = vunpack.c.l.b16 %v892
        %v901 = vunpack.c.l.b16 %v893
        %v902 = vunpack.c.l.b16 %v894
        %v903 = vunpack.c.l.b16 %v895
        %v904 = vpack.c.b16 %v901, %v900
        %v905 = vpack.c.b16 %v903, %v902
        %v909 = vsel %vm476, %v891, 0
        %911 = vmatpush.bf16.msra.mxu0 0
        %912 = vmatpush.bf16.msra.mxu0 0
        %913 = vmatpush.bf16.msra.mxu0 0
        %914 = vmatpush.bf16.msra.mxu0 0
        %915 = vmatpush.bf16.msra.mxu0 0
        %916 = vmatpush.bf16.msra.mxu0 0
        %917 = vmatpush.bf16.msra.mxu0 %v905
        %918 = vmatpush.bf16.msra.mxu0 %v904
        %919 = vmatmul.bf16.gmra.mxu0 %v909
        %v920 = vpop.f32.mrf.mxu0
        %v921 = vadd.f32 0.0, %v920
        %v922 = vpop.f32.mrf.mxu0
        %923 = vdwg.mxu0
        %v924 = vrot.slane %v921, 5
        %v925 = vsel %vm494, %v924, 0.0
        %v926 = vadd.f32 %v925, 0.0
        %s927 = scalar_lea.vmem %s2, 16
        %v928 = vld [vmem:[%s927] sm:$0xf]
        %v929 = vld [vmem:[%s927 + $0x4] sm:$0xf]
        %v930 = vld [vmem:[%s927 + $0x8] sm:$0xf]
        %v931 = vld [vmem:[%s927 + $0xc] sm:$0xf]
        %v936 = vunpack.c.l.b16 %v928
        %v937 = vunpack.c.l.b16 %v929
        %v938 = vunpack.c.l.b16 %v930
        %v939 = vunpack.c.l.b16 %v931
        %v940 = vpack.c.b16 %v937, %v936
        %v941 = vpack.c.b16 %v939, %v938
        %944 = vmatpush.bf16.msra.mxu0 0
        %945 = vmatpush.bf16.msra.mxu0 0
        %946 = vmatpush.bf16.msra.mxu0 0
        %947 = vmatpush.bf16.msra.mxu0 0
        %948 = vmatpush.bf16.msra.mxu0 0
        %949 = vmatpush.bf16.msra.mxu0 0
        %950 = vmatpush.bf16.msra.mxu0 %v941
        %951 = vmatpush.bf16.msra.mxu0 %v940
        %952 = vmatmul.bf16.gmra.mxu0 %v909
        %v953 = vpop.f32.mrf.mxu0
        %v954 = vadd.f32 0.0, %v953
        %v955 = vpop.f32.mrf.mxu0
        %956 = vdwg.mxu0
        %v957 = vrot.slane %v954, 6
        %v958 = vsel %vm528, %v957, 0.0
        %v959 = vadd.f32 %v926, %v958
        %s960 = scalar_lea.vmem %s2, 32
        %v961 = vld [vmem:[%s960] sm:$0xf]
        %v962 = vld [vmem:[%s960 + $0x4] sm:$0xf]
        %v963 = vld [vmem:[%s960 + $0x8] sm:$0xf]
        %v964 = vld [vmem:[%s960 + $0xc] sm:$0xf]
        %v969 = vunpack.c.l.b16 %v961
        %v970 = vunpack.c.l.b16 %v962
        %v971 = vunpack.c.l.b16 %v963
        %v972 = vunpack.c.l.b16 %v964
        %v973 = vpack.c.b16 %v970, %v969
        %v974 = vpack.c.b16 %v972, %v971
        %977 = vmatpush.bf16.msra.mxu0 0
        %978 = vmatpush.bf16.msra.mxu0 0
        %979 = vmatpush.bf16.msra.mxu0 0
        %980 = vmatpush.bf16.msra.mxu0 0
        %981 = vmatpush.bf16.msra.mxu0 0
        %982 = vmatpush.bf16.msra.mxu0 0
        %983 = vmatpush.bf16.msra.mxu0 %v974
        %984 = vmatpush.bf16.msra.mxu0 %v973
        %985 = vmatmul.bf16.gmra.mxu0 %v909
        %v986 = vpop.f32.mrf.mxu0
        %v987 = vadd.f32 0.0, %v986
        %v988 = vpop.f32.mrf.mxu0
        %989 = vdwg.mxu0
        %v990 = vrot.slane %v987, 7
        %v991 = vsel %vm562, %v990, 0.0
        %v992 = vadd.f32 %v959, %v991
        %s993 = scalar_lea.vmem %s2, 48
        %v994 = vld [vmem:[%s993] sm:$0xf]
        %v995 = vld [vmem:[%s993 + $0x4] sm:$0xf]
        %v996 = vld [vmem:[%s993 + $0x8] sm:$0xf]
        %v997 = vld [vmem:[%s993 + $0xc] sm:$0xf]
        %v1002 = vunpack.c.l.b16 %v994
        %v1003 = vunpack.c.l.b16 %v995
        %v1004 = vunpack.c.l.b16 %v996
        %v1005 = vunpack.c.l.b16 %v997
        %v1006 = vpack.c.b16 %v1003, %v1002
        %v1007 = vpack.c.b16 %v1005, %v1004
        %1010 = vmatpush.bf16.msra.mxu0 0
        %1011 = vmatpush.bf16.msra.mxu0 0
        %1012 = vmatpush.bf16.msra.mxu0 0
        %1013 = vmatpush.bf16.msra.mxu0 0
        %1014 = vmatpush.bf16.msra.mxu0 0
        %1015 = vmatpush.bf16.msra.mxu0 0
        %1016 = vmatpush.bf16.msra.mxu0 %v1007
        %1017 = vmatpush.bf16.msra.mxu0 %v1006
        %1018 = vmatmul.bf16.gmra.mxu0 %v909
        %v1019 = vpop.f32.mrf.mxu0
        %v1020 = vadd.f32 0.0, %v1019
        %v1021 = vpop.f32.mrf.mxu0
        %1022 = vdwg.mxu0
        %v1023 = vadd.f32 %v992, %v1020
        %s1024 = scalar_lea.vmem %s2, 64
        %v1025 = vld [vmem:[%s1024] sm:$0xf]
        %v1026 = vld [vmem:[%s1024 + $0x4] sm:$0xf]
        %v1027 = vld [vmem:[%s1024 + $0x8] sm:$0xf]
        %v1028 = vld [vmem:[%s1024 + $0xc] sm:$0xf]
        %v1033 = vunpack.c.l.b16 %v1025
        %v1034 = vunpack.c.l.b16 %v1026
        %v1035 = vunpack.c.l.b16 %v1027
        %v1036 = vunpack.c.l.b16 %v1028
        %v1037 = vpack.c.b16 %v1034, %v1033
        %v1038 = vpack.c.b16 %v1036, %v1035
        %1041 = vmatpush.bf16.msra.mxu0 0
        %1042 = vmatpush.bf16.msra.mxu0 0
        %1043 = vmatpush.bf16.msra.mxu0 0
        %1044 = vmatpush.bf16.msra.mxu0 0
        %1045 = vmatpush.bf16.msra.mxu0 0
        %1046 = vmatpush.bf16.msra.mxu0 0
        %1047 = vmatpush.bf16.msra.mxu0 %v1038
        %1048 = vmatpush.bf16.msra.mxu0 %v1037
        %1049 = vmatmul.bf16.gmra.mxu0 %v909
        %v1050 = vpop.f32.mrf.mxu0
        %v1051 = vadd.f32 0.0, %v1050
        %v1052 = vpop.f32.mrf.mxu0
        %1053 = vdwg.mxu0
        %v1054 = vrot.slane %v1051, 1
        %v1055 = vsel %vm627, %v1054, 0.0
        %v1056 = vadd.f32 %v1023, %v1055
        %s1057 = scalar_lea.vmem %s2, 80
        %v1058 = vld [vmem:[%s1057] sm:$0xf]
        %v1059 = vld [vmem:[%s1057 + $0x4] sm:$0xf]
        %v1060 = vld [vmem:[%s1057 + $0x8] sm:$0xf]
        %v1061 = vld [vmem:[%s1057 + $0xc] sm:$0xf]
        %v1066 = vunpack.c.l.b16 %v1058
        %v1067 = vunpack.c.l.b16 %v1059
        %v1068 = vunpack.c.l.b16 %v1060
        %v1069 = vunpack.c.l.b16 %v1061
        %v1070 = vpack.c.b16 %v1067, %v1066
        %v1071 = vpack.c.b16 %v1069, %v1068
        %1074 = vmatpush.bf16.msra.mxu0 0
        %1075 = vmatpush.bf16.msra.mxu0 0
        %1076 = vmatpush.bf16.msra.mxu0 0
        %1077 = vmatpush.bf16.msra.mxu0 0
        %1078 = vmatpush.bf16.msra.mxu0 0
        %1079 = vmatpush.bf16.msra.mxu0 0
        %1080 = vmatpush.bf16.msra.mxu0 %v1071
        %1081 = vmatpush.bf16.msra.mxu0 %v1070
        %1082 = vmatmul.bf16.gmra.mxu0 %v909
        %v1083 = vpop.f32.mrf.mxu0
        %v1084 = vadd.f32 0.0, %v1083
        %v1085 = vpop.f32.mrf.mxu0
        %1086 = vdwg.mxu0
        %v1087 = vrot.slane %v1084, 2
        %v1088 = vsel %vm661, %v1087, 0.0
        %v1089 = vadd.f32 %v1056, %v1088
        %s1090 = scalar_lea.vmem %s2, 96
        %v1091 = vld [vmem:[%s1090] sm:$0xf]
        %v1092 = vld [vmem:[%s1090 + $0x4] sm:$0xf]
        %v1093 = vld [vmem:[%s1090 + $0x8] sm:$0xf]
        %v1094 = vld [vmem:[%s1090 + $0xc] sm:$0xf]
        %v1099 = vunpack.c.l.b16 %v1091
        %v1100 = vunpack.c.l.b16 %v1092
        %v1101 = vunpack.c.l.b16 %v1093
        %v1102 = vunpack.c.l.b16 %v1094
        %v1103 = vpack.c.b16 %v1100, %v1099
        %v1104 = vpack.c.b16 %v1102, %v1101
        %1107 = vmatpush.bf16.msra.mxu0 0
        %1108 = vmatpush.bf16.msra.mxu0 0
        %1109 = vmatpush.bf16.msra.mxu0 0
        %1110 = vmatpush.bf16.msra.mxu0 0
        %1111 = vmatpush.bf16.msra.mxu0 0
        %1112 = vmatpush.bf16.msra.mxu0 0
        %1113 = vmatpush.bf16.msra.mxu0 %v1104
        %1114 = vmatpush.bf16.msra.mxu0 %v1103
        %1115 = vmatmul.bf16.gmra.mxu0 %v909
        %v1116 = vpop.f32.mrf.mxu0
        %v1117 = vadd.f32 0.0, %v1116
        %v1118 = vpop.f32.mrf.mxu0
        %1119 = vdwg.mxu0
        %v1120 = vrot.slane %v1117, 3
        %v1121 = vsel %vm695, %v1120, 0.0
        %v1122 = vadd.f32 %v1089, %v1121
        %v1123 = vstv %s786
        %v1124 = vadd.f32 %v1122, %v1123
        %v1125 = vsub.f32 0.0, %v1124
        %v1126 = vmul.f32 %v1125, 1.442695
        %v1127 = vpow.pop %v1126
        %v1128 = vadd.f32 %v1127, 1.0
        %v1129 = vrcp.pop %v1128
        %v1130 = vmul.f32 %v1129, 0.33333334
        %v1132 = vrot.slane %v705, 1
        %v1133 = vrot.slane %v705, 2
        %v1134 = vrot.slane %v705, 3
        %v1135 = vrot.slane %v705, 4
        %v1136 = vrot.slane %v705, 5
        %v1137 = vrot.slane %v705, 6
        %v1138 = vrot.slane %v705, 7
        %v1139 = vperm.slane %v1130, 0
        %v1140 = vlaneseq
        %v1141 = vshrl.u32 %v1140, 7
        %1143 = vset.pattern.permute.xlu0 %v1141
        %1144 = vperm.xlu0 %1143, %v1139
        %v1145 = vpop.permute.xlu0 %1144
        %v1146 = vlaneseq
        %v1147 = vshrl.u32 %v1146, 7
        %v1148 = vadd.s32 %v1147, 8
        %1149 = vset.pattern.permute.xlu0 %v1148
        %1150 = vperm.xlu0 %1149, %v1139
        %v1151 = vpop.permute.xlu0 %1150
        %v1152 = vperm.slane %v1130, 1
        %v1153 = vlaneseq
        %v1154 = vshrl.u32 %v1153, 7
        %1156 = vset.pattern.permute.xlu0 %v1154
        %1157 = vperm.xlu0 %1156, %v1152
        %v1158 = vpop.permute.xlu0 %1157
        %v1159 = vlaneseq
        %v1160 = vshrl.u32 %v1159, 7
        %v1161 = vadd.s32 %v1160, 8
        %1162 = vset.pattern.permute.xlu0 %v1161
        %1163 = vperm.xlu0 %1162, %v1152
        %v1164 = vpop.permute.xlu0 %1163
        %v1165 = vperm.slane %v1130, 2
        %v1166 = vlaneseq
        %v1167 = vshrl.u32 %v1166, 7
        %1169 = vset.pattern.permute.xlu0 %v1167
        %1170 = vperm.xlu0 %1169, %v1165
        %v1171 = vpop.permute.xlu0 %1170
        %v1172 = vlaneseq
        %v1173 = vshrl.u32 %v1172, 7
        %v1174 = vadd.s32 %v1173, 8
        %1175 = vset.pattern.permute.xlu0 %v1174
        %1176 = vperm.xlu0 %1175, %v1165
        %v1177 = vpop.permute.xlu0 %1176
        %v1178 = vperm.slane %v1130, 3
        %v1179 = vlaneseq
        %v1180 = vshrl.u32 %v1179, 7
        %1182 = vset.pattern.permute.xlu0 %v1180
        %1183 = vperm.xlu0 %1182, %v1178
        %v1184 = vpop.permute.xlu0 %1183
        %v1185 = vlaneseq
        %v1186 = vshrl.u32 %v1185, 7
        %v1187 = vadd.s32 %v1186, 8
        %1188 = vset.pattern.permute.xlu0 %v1187
        %1189 = vperm.xlu0 %1188, %v1178
        %v1190 = vpop.permute.xlu0 %1189
        %v1191 = vperm.slane %v1130, 4
        %v1192 = vlaneseq
        %v1193 = vshrl.u32 %v1192, 7
        %1195 = vset.pattern.permute.xlu0 %v1193
        %1196 = vperm.xlu0 %1195, %v1191
        %v1197 = vpop.permute.xlu0 %1196
        %v1198 = vlaneseq
        %v1199 = vshrl.u32 %v1198, 7
        %v1200 = vadd.s32 %v1199, 8
        %1201 = vset.pattern.permute.xlu0 %v1200
        %1202 = vperm.xlu0 %1201, %v1191
        %v1203 = vpop.permute.xlu0 %1202
        %v1204 = vperm.slane %v1130, 5
        %v1205 = vlaneseq
        %v1206 = vshrl.u32 %v1205, 7
        %1208 = vset.pattern.permute.xlu0 %v1206
        %1209 = vperm.xlu0 %1208, %v1204
        %v1210 = vpop.permute.xlu0 %1209
        %v1211 = vlaneseq
        %v1212 = vshrl.u32 %v1211, 7
        %v1213 = vadd.s32 %v1212, 8
        %1214 = vset.pattern.permute.xlu0 %v1213
        %1215 = vperm.xlu0 %1214, %v1204
        %v1216 = vpop.permute.xlu0 %1215
        %v1217 = vperm.slane %v1130, 6
        %v1218 = vlaneseq
        %v1219 = vshrl.u32 %v1218, 7
        %1221 = vset.pattern.permute.xlu0 %v1219
        %1222 = vperm.xlu0 %1221, %v1217
        %v1223 = vpop.permute.xlu0 %1222
        %v1224 = vlaneseq
        %v1225 = vshrl.u32 %v1224, 7
        %v1226 = vadd.s32 %v1225, 8
        %1227 = vset.pattern.permute.xlu0 %v1226
        %1228 = vperm.xlu0 %1227, %v1217
        %v1229 = vpop.permute.xlu0 %1228
        %v1230 = vperm.slane %v1130, 7
        %v1231 = vlaneseq
        %v1232 = vshrl.u32 %v1231, 7
        %1234 = vset.pattern.permute.xlu0 %v1232
        %1235 = vperm.xlu0 %1234, %v1230
        %v1236 = vpop.permute.xlu0 %1235
        %v1237 = vlaneseq
        %v1238 = vshrl.u32 %v1237, 7
        %v1239 = vadd.s32 %v1238, 8
        %1240 = vset.pattern.permute.xlu0 %v1239
        %1241 = vperm.xlu0 %1240, %v1230
        %v1242 = vpop.permute.xlu0 %1241
        %v1243 = vperm.slane %v705, 0
        %v1244 = vperm.slane %v1132, 0
        %v1245 = vperm.slane %v1133, 0
        %v1246 = vperm.slane %v1134, 0
        %v1247 = vperm.slane %v1135, 0
        %v1248 = vperm.slane %v1136, 0
        %v1249 = vperm.slane %v1137, 0
        %v1250 = vperm.slane %v1138, 0
        %v1259 = vadd.f32 %v1243, %v1145
        %v1260 = vadd.f32 %v1243, %v1151
        %v1261 = vadd.f32 %v1244, %v1158
        %v1262 = vadd.f32 %v1244, %v1164
        %v1263 = vadd.f32 %v1245, %v1171
        %v1264 = vadd.f32 %v1245, %v1177
        %v1265 = vadd.f32 %v1246, %v1184
        %v1266 = vadd.f32 %v1246, %v1190
        %v1267 = vadd.f32 %v1247, %v1197
        %v1268 = vadd.f32 %v1247, %v1203
        %v1269 = vadd.f32 %v1248, %v1210
        %v1270 = vadd.f32 %v1248, %v1216
        %v1271 = vadd.f32 %v1249, %v1223
        %v1272 = vadd.f32 %v1249, %v1229
        %v1273 = vadd.f32 %v1250, %v1236
        %v1274 = vadd.f32 %v1250, %v1242
        %v1275 = vmax.f32 %v255, %v273
        %v1276 = vmax.f32 %v264, %v282
        %v1277 = vmax.f32 %v1275, %v291
        %v1278 = vmax.f32 %v1276, %v300
        %v1279 = vmax.f32 %v1277, %v309
        %v1280 = vmax.f32 %v1278, %v318
        %v1281 = vmax.f32 %v1279, %v1280
        %v1282 = vmax.f32 %v256, %v274
        %v1283 = vmax.f32 %v265, %v283
        %v1284 = vmax.f32 %v1282, %v292
        %v1285 = vmax.f32 %v1283, %v301
        %v1286 = vmax.f32 %v1284, %v310
        %v1287 = vmax.f32 %v1285, %v319
        %v1288 = vmax.f32 %v1286, %v1287
        %v1289 = vadd.f32 %v327, %v336
        %v1290 = vadd.f32 %v1289, %v345
        %v1291 = vadd.f32 %v1290, %v354
        %v1292 = vadd.f32 %v1291, %v363
        %v1293 = vadd.f32 %v1292, %v372
        %v1294 = vadd.f32 %v1293, %v381
        %v1295 = vadd.f32 %v1294, %v390
        %v1296 = vadd.f32 %v328, %v337
        %v1297 = vadd.f32 %v1296, %v346
        %v1298 = vadd.f32 %v1297, %v355
        %v1299 = vadd.f32 %v1298, %v364
        %v1300 = vadd.f32 %v1299, %v373
        %v1301 = vadd.f32 %v1300, %v382
        %v1302 = vadd.f32 %v1301, %v391
        %v1303 = vrcp.pop 8.0
        %v1304 = vmul.f32 8.0, %v1303
        %v1305 = vsub.f32 1.0, %v1304
        %v1306 = vmul.f32 %v1303, %v1305
        %v1307 = vadd.f32 %v1303, %v1306
        %vm1308 = vweird.f32 %v1303
        %v1309 = vsel %vm1308, %v1303, %v1307
        %v1310 = vmul.f32 %v1295, %v1309
        %v1311 = vmul.f32 %v1302, %v1309
        %s1312 = sld [smem:[#allocation2]]
        %1315 = vrot.lane.b32.xlu0 %v1310, 16
        %v1316 = vpop.permute.xlu0 %1315
        %1317 = vrot.lane.b32.xlu0 %v1311, 16
        %v1318 = vpop.permute.xlu0 %1317
        %v1321 = vsel %vm254, %v1281, %v1316
        %v1322 = vsel %vm254, %v1288, %v1318
        %v1323 = vpack.c.bf16 %v1322, %v1321
        %v1324 = vadd.s32 %v459, 8
        %v1325 = vld [vmem:[%s3] sm:$0xf]
        %v1326 = vld [vmem:[%s3 + $0x4] sm:$0xf]
        %v1327 = vld [vmem:[%s3 + $0x8] sm:$0xf]
        %v1328 = vld [vmem:[%s3 + $0xc] sm:$0xf]
        %v1333 = vunpack.c.l.b16 %v1325
        %v1334 = vunpack.c.l.b16 %v1326
        %v1335 = vunpack.c.l.b16 %v1327
        %v1336 = vunpack.c.l.b16 %v1328
        %v1337 = vpack.c.b16 %v1334, %v1333
        %v1338 = vpack.c.b16 %v1336, %v1335
        %v1342 = vsel %vm476, %v1323, 0
        %1344 = vmatpush.bf16.msra.mxu0 0
        %1345 = vmatpush.bf16.msra.mxu0 0
        %1346 = vmatpush.bf16.msra.mxu0 0
        %1347 = vmatpush.bf16.msra.mxu0 0
        %1348 = vmatpush.bf16.msra.mxu0 0
        %1349 = vmatpush.bf16.msra.mxu0 0
        %1350 = vmatpush.bf16.msra.mxu0 %v1338
        %1351 = vmatpush.bf16.msra.mxu0 %v1337
        %1352 = vmatmul.bf16.gmra.mxu0 %v1342
        %v1353 = vpop.f32.mrf.mxu0
        %v1354 = vadd.f32 0.0, %v1353
        %v1355 = vpop.f32.mrf.mxu0
        %v1356 = vadd.f32 0.0, %v1355
        %1357 = vdwg.mxu0
        %v1358 = vrot.slane %v1354, 5
        %v1359 = vrot.slane %v1356, 5
        %vm1360 = vcmp.lt.s32.totalorder %v459, 3
        %v1361 = vsel %vm1360, %v1358, %v1359
        %v1362 = vsel %vm1360, %v1359, %v1358
        %vm1363 = vcmp.ge.s32.totalorder %v1324, 3
        %v1364 = vsel %vm494, %v1362, 0.0
        %v1365 = vsel %vm1363, %v1361, 0.0
        %v1366 = vadd.f32 %v1364, 0.0
        %v1367 = vadd.f32 %v1365, 0.0
        %s1368 = scalar_lea.vmem %s3, 16
        %v1369 = vld [vmem:[%s1368] sm:$0xf]
        %v1370 = vld [vmem:[%s1368 + $0x4] sm:$0xf]
        %v1371 = vld [vmem:[%s1368 + $0x8] sm:$0xf]
        %v1372 = vld [vmem:[%s1368 + $0xc] sm:$0xf]
        %v1377 = vunpack.c.l.b16 %v1369
        %v1378 = vunpack.c.l.b16 %v1370
        %v1379 = vunpack.c.l.b16 %v1371
        %v1380 = vunpack.c.l.b16 %v1372
        %v1381 = vpack.c.b16 %v1378, %v1377
        %v1382 = vpack.c.b16 %v1380, %v1379
        %1385 = vmatpush.bf16.msra.mxu0 0
        %1386 = vmatpush.bf16.msra.mxu0 0
        %1387 = vmatpush.bf16.msra.mxu0 0
        %1388 = vmatpush.bf16.msra.mxu0 0
        %1389 = vmatpush.bf16.msra.mxu0 0
        %1390 = vmatpush.bf16.msra.mxu0 0
        %1391 = vmatpush.bf16.msra.mxu0 %v1382
        %1392 = vmatpush.bf16.msra.mxu0 %v1381
        %1393 = vmatmul.bf16.gmra.mxu0 %v1342
        %v1394 = vpop.f32.mrf.mxu0
        %v1395 = vadd.f32 0.0, %v1394
        %v1396 = vpop.f32.mrf.mxu0
        %v1397 = vadd.f32 0.0, %v1396
        %1398 = vdwg.mxu0
        %v1399 = vrot.slane %v1395, 6
        %v1400 = vrot.slane %v1397, 6
        %vm1401 = vcmp.lt.s32.totalorder %v459, 2
        %v1402 = vsel %vm1401, %v1399, %v1400
        %v1403 = vsel %vm1401, %v1400, %v1399
        %vm1404 = vcmp.ge.s32.totalorder %v1324, 2
        %v1405 = vsel %vm528, %v1403, 0.0
        %v1406 = vsel %vm1404, %v1402, 0.0
        %v1407 = vadd.f32 %v1366, %v1405
        %v1408 = vadd.f32 %v1367, %v1406
        %s1409 = scalar_lea.vmem %s3, 32
        %v1410 = vld [vmem:[%s1409] sm:$0xf]
        %v1411 = vld [vmem:[%s1409 + $0x4] sm:$0xf]
        %v1412 = vld [vmem:[%s1409 + $0x8] sm:$0xf]
        %v1413 = vld [vmem:[%s1409 + $0xc] sm:$0xf]
        %v1418 = vunpack.c.l.b16 %v1410
        %v1419 = vunpack.c.l.b16 %v1411
        %v1420 = vunpack.c.l.b16 %v1412
        %v1421 = vunpack.c.l.b16 %v1413
        %v1422 = vpack.c.b16 %v1419, %v1418
        %v1423 = vpack.c.b16 %v1421, %v1420
        %1426 = vmatpush.bf16.msra.mxu0 0
        %1427 = vmatpush.bf16.msra.mxu0 0
        %1428 = vmatpush.bf16.msra.mxu0 0
        %1429 = vmatpush.bf16.msra.mxu0 0
        %1430 = vmatpush.bf16.msra.mxu0 0
        %1431 = vmatpush.bf16.msra.mxu0 0
        %1432 = vmatpush.bf16.msra.mxu0 %v1423
        %1433 = vmatpush.bf16.msra.mxu0 %v1422
        %1434 = vmatmul.bf16.gmra.mxu0 %v1342
        %v1435 = vpop.f32.mrf.mxu0
        %v1436 = vadd.f32 0.0, %v1435
        %v1437 = vpop.f32.mrf.mxu0
        %v1438 = vadd.f32 0.0, %v1437
        %1439 = vdwg.mxu0
        %v1440 = vrot.slane %v1436, 7
        %v1441 = vrot.slane %v1438, 7
        %vm1442 = vcmp.lt.s32.totalorder %v459, 1
        %v1443 = vsel %vm1442, %v1440, %v1441
        %v1444 = vsel %vm1442, %v1441, %v1440
        %vm1445 = vcmp.ge.s32.totalorder %v1324, 1
        %v1446 = vsel %vm562, %v1444, 0.0
        %v1447 = vsel %vm1445, %v1443, 0.0
        %v1448 = vadd.f32 %v1407, %v1446
        %v1449 = vadd.f32 %v1408, %v1447
        %s1450 = scalar_lea.vmem %s3, 48
        %v1451 = vld [vmem:[%s1450] sm:$0xf]
        %v1452 = vld [vmem:[%s1450 + $0x4] sm:$0xf]
        %v1453 = vld [vmem:[%s1450 + $0x8] sm:$0xf]
        %v1454 = vld [vmem:[%s1450 + $0xc] sm:$0xf]
        %v1459 = vunpack.c.l.b16 %v1451
        %v1460 = vunpack.c.l.b16 %v1452
        %v1461 = vunpack.c.l.b16 %v1453
        %v1462 = vunpack.c.l.b16 %v1454
        %v1463 = vpack.c.b16 %v1460, %v1459
        %v1464 = vpack.c.b16 %v1462, %v1461
        %1467 = vmatpush.bf16.msra.mxu0 0
        %1468 = vmatpush.bf16.msra.mxu0 0
        %1469 = vmatpush.bf16.msra.mxu0 0
        %1470 = vmatpush.bf16.msra.mxu0 0
        %1471 = vmatpush.bf16.msra.mxu0 0
        %1472 = vmatpush.bf16.msra.mxu0 0
        %1473 = vmatpush.bf16.msra.mxu0 %v1464
        %1474 = vmatpush.bf16.msra.mxu0 %v1463
        %1475 = vmatmul.bf16.gmra.mxu0 %v1342
        %v1476 = vpop.f32.mrf.mxu0
        %v1477 = vadd.f32 0.0, %v1476
        %v1478 = vpop.f32.mrf.mxu0
        %v1479 = vadd.f32 0.0, %v1478
        %1480 = vdwg.mxu0
        %v1481 = vadd.f32 %v1448, %v1477
        %v1482 = vadd.f32 %v1449, %v1479
        %s1483 = scalar_lea.vmem %s3, 64
        %v1484 = vld [vmem:[%s1483] sm:$0xf]
        %v1485 = vld [vmem:[%s1483 + $0x4] sm:$0xf]
        %v1486 = vld [vmem:[%s1483 + $0x8] sm:$0xf]
        %v1487 = vld [vmem:[%s1483 + $0xc] sm:$0xf]
        %v1492 = vunpack.c.l.b16 %v1484
        %v1493 = vunpack.c.l.b16 %v1485
        %v1494 = vunpack.c.l.b16 %v1486
        %v1495 = vunpack.c.l.b16 %v1487
        %v1496 = vpack.c.b16 %v1493, %v1492
        %v1497 = vpack.c.b16 %v1495, %v1494
        %1500 = vmatpush.bf16.msra.mxu0 0
        %1501 = vmatpush.bf16.msra.mxu0 0
        %1502 = vmatpush.bf16.msra.mxu0 0
        %1503 = vmatpush.bf16.msra.mxu0 0
        %1504 = vmatpush.bf16.msra.mxu0 0
        %1505 = vmatpush.bf16.msra.mxu0 0
        %1506 = vmatpush.bf16.msra.mxu0 %v1497
        %1507 = vmatpush.bf16.msra.mxu0 %v1496
        %1508 = vmatmul.bf16.gmra.mxu0 %v1342
        %v1509 = vpop.f32.mrf.mxu0
        %v1510 = vadd.f32 0.0, %v1509
        %v1511 = vpop.f32.mrf.mxu0
        %v1512 = vadd.f32 0.0, %v1511
        %1513 = vdwg.mxu0
        %v1514 = vrot.slane %v1510, 1
        %v1515 = vrot.slane %v1512, 1
        %vm1516 = vcmp.lt.s32.totalorder %v459, 7
        %v1517 = vsel %vm1516, %v1514, %v1515
        %v1518 = vsel %vm1516, %v1515, %v1514
        %vm1519 = vcmp.le.s32.totalorder %v459, 14
        %vm1520 = vcmp.le.s32.totalorder %v1324, 14
        %v1521 = vsel %vm1519, %v1517, 0.0
        %v1522 = vsel %vm1520, %v1518, 0.0
        %v1523 = vadd.f32 %v1481, %v1521
        %v1524 = vadd.f32 %v1482, %v1522
        %s1525 = scalar_lea.vmem %s3, 80
        %v1526 = vld [vmem:[%s1525] sm:$0xf]
        %v1527 = vld [vmem:[%s1525 + $0x4] sm:$0xf]
        %v1528 = vld [vmem:[%s1525 + $0x8] sm:$0xf]
        %v1529 = vld [vmem:[%s1525 + $0xc] sm:$0xf]
        %v1534 = vunpack.c.l.b16 %v1526
        %v1535 = vunpack.c.l.b16 %v1527
        %v1536 = vunpack.c.l.b16 %v1528
        %v1537 = vunpack.c.l.b16 %v1529
        %v1538 = vpack.c.b16 %v1535, %v1534
        %v1539 = vpack.c.b16 %v1537, %v1536
        %1542 = vmatpush.bf16.msra.mxu0 0
        %1543 = vmatpush.bf16.msra.mxu0 0
        %1544 = vmatpush.bf16.msra.mxu0 0
        %1545 = vmatpush.bf16.msra.mxu0 0
        %1546 = vmatpush.bf16.msra.mxu0 0
        %1547 = vmatpush.bf16.msra.mxu0 0
        %1548 = vmatpush.bf16.msra.mxu0 %v1539
        %1549 = vmatpush.bf16.msra.mxu0 %v1538
        %1550 = vmatmul.bf16.gmra.mxu0 %v1342
        %v1551 = vpop.f32.mrf.mxu0
        %v1552 = vadd.f32 0.0, %v1551
        %v1553 = vpop.f32.mrf.mxu0
        %v1554 = vadd.f32 0.0, %v1553
        %1555 = vdwg.mxu0
        %v1556 = vrot.slane %v1552, 2
        %v1557 = vrot.slane %v1554, 2
        %vm1558 = vcmp.lt.s32.totalorder %v459, 6
        %v1559 = vsel %vm1558, %v1556, %v1557
        %v1560 = vsel %vm1558, %v1557, %v1556
        %vm1561 = vcmp.le.s32.totalorder %v459, 13
        %vm1562 = vcmp.le.s32.totalorder %v1324, 13
        %v1563 = vsel %vm1561, %v1559, 0.0
        %v1564 = vsel %vm1562, %v1560, 0.0
        %v1565 = vadd.f32 %v1523, %v1563
        %v1566 = vadd.f32 %v1524, %v1564
        %s1567 = scalar_lea.vmem %s3, 96
        %v1568 = vld [vmem:[%s1567] sm:$0xf]
        %v1569 = vld [vmem:[%s1567 + $0x4] sm:$0xf]
        %v1570 = vld [vmem:[%s1567 + $0x8] sm:$0xf]
        %v1571 = vld [vmem:[%s1567 + $0xc] sm:$0xf]
        %v1576 = vunpack.c.l.b16 %v1568
        %v1577 = vunpack.c.l.b16 %v1569
        %v1578 = vunpack.c.l.b16 %v1570
        %v1579 = vunpack.c.l.b16 %v1571
        %v1580 = vpack.c.b16 %v1577, %v1576
        %v1581 = vpack.c.b16 %v1579, %v1578
        %1584 = vmatpush.bf16.msra.mxu0 0
        %1585 = vmatpush.bf16.msra.mxu0 0
        %1586 = vmatpush.bf16.msra.mxu0 0
        %1587 = vmatpush.bf16.msra.mxu0 0
        %1588 = vmatpush.bf16.msra.mxu0 0
        %1589 = vmatpush.bf16.msra.mxu0 0
        %1590 = vmatpush.bf16.msra.mxu0 %v1581
        %1591 = vmatpush.bf16.msra.mxu0 %v1580
        %1592 = vmatmul.bf16.gmra.mxu0 %v1342
        %v1593 = vpop.f32.mrf.mxu0
        %v1594 = vadd.f32 0.0, %v1593
        %v1595 = vpop.f32.mrf.mxu0
        %v1596 = vadd.f32 0.0, %v1595
        %1597 = vdwg.mxu0
        %v1598 = vrot.slane %v1594, 3
        %v1599 = vrot.slane %v1596, 3
        %vm1600 = vcmp.lt.s32.totalorder %v459, 5
        %v1601 = vsel %vm1600, %v1598, %v1599
        %v1602 = vsel %vm1600, %v1599, %v1598
        %vm1603 = vcmp.le.s32.totalorder %v459, 12
        %vm1604 = vcmp.le.s32.totalorder %v1324, 12
        %v1605 = vsel %vm1603, %v1601, 0.0
        %v1606 = vsel %vm1604, %v1602, 0.0
        %v1607 = vadd.f32 %v1565, %v1605
        %v1608 = vadd.f32 %v1566, %v1606
        %v1609 = vstv %s1312
        %v1610 = vadd.f32 %v1607, %v1609
        %v1611 = vadd.f32 %v1608, %v1609
        %v1612 = vsub.f32 0.0, %v1610
        %v1613 = vsub.f32 0.0, %v1611
        %v1614 = vmul.f32 %v1612, 1.442695
        %v1615 = vpow.pop %v1614
        %v1616 = vmul.f32 %v1613, 1.442695
        %v1617 = vpow.pop %v1616
        %v1618 = vadd.f32 %v1615, 1.0
        %v1619 = vadd.f32 %v1617, 1.0
        %v1620 = vrcp.pop %v1618
        %v1621 = vrcp.pop %v1619
        %v1622 = vmul.f32 %v1620, 0.33333334
        %v1623 = vmul.f32 %v1621, 0.33333334
        %v1624 = vadd.f32 %v1259, %v1622
        %v1625 = vadd.f32 %v1260, %v1623
        %v1626 = vadd.f32 %v1261, %v1622
        %v1627 = vadd.f32 %v1262, %v1623
        %v1628 = vadd.f32 %v1263, %v1622
        %v1629 = vadd.f32 %v1264, %v1623
        %v1630 = vadd.f32 %v1265, %v1622
        %v1631 = vadd.f32 %v1266, %v1623
        %v1632 = vadd.f32 %v1267, %v1622
        %v1633 = vadd.f32 %v1268, %v1623
        %v1634 = vadd.f32 %v1269, %v1622
        %v1635 = vadd.f32 %v1270, %v1623
        %v1636 = vadd.f32 %v1271, %v1622
        %v1637 = vadd.f32 %v1272, %v1623
        %v1638 = vadd.f32 %v1273, %v1622
        %v1639 = vadd.f32 %v1274, %v1623
        %v1640 = vmul.f32 %v238, %v1624
        %v1641 = vmul.f32 %v239, %v1625
        %v1642 = vmul.f32 %v240, %v1626
        %v1643 = vmul.f32 %v241, %v1627
        %v1644 = vmul.f32 %v242, %v1628
        %v1645 = vmul.f32 %v243, %v1629
        %v1646 = vmul.f32 %v244, %v1630
        %v1647 = vmul.f32 %v245, %v1631
        %v1648 = vmul.f32 %v246, %v1632
        %v1649 = vmul.f32 %v247, %v1633
        %v1650 = vmul.f32 %v248, %v1634
        %v1651 = vmul.f32 %v249, %v1635
        %v1652 = vmul.f32 %v250, %v1636
        %v1653 = vmul.f32 %v251, %v1637
        %v1654 = vmul.f32 %v252, %v1638
        %v1655 = vmul.f32 %v253, %v1639
        %1656 = vst.msk [vmem:[%s231] sm:$0xff] %vm254, %v1640
        %1657 = vst.msk [vmem:[%s231 + $0x8] sm:$0xff] %vm254, %v1641
        %1658 = vst.msk [vmem:[%s231 + $0x10] sm:$0xff] %vm254, %v1642
        %1659 = vst.msk [vmem:[%s231 + $0x18] sm:$0xff] %vm254, %v1643
        %1660 = vst.msk [vmem:[%s231 + $0x20] sm:$0xff] %vm254, %v1644
        %1661 = vst.msk [vmem:[%s231 + $0x28] sm:$0xff] %vm254, %v1645
        %1662 = vst.msk [vmem:[%s231 + $0x30] sm:$0xff] %vm254, %v1646
        %1663 = vst.msk [vmem:[%s231 + $0x38] sm:$0xff] %vm254, %v1647
        %1664 = vst.msk [vmem:[%s231 + $0x40] sm:$0xff] %vm254, %v1648
        %1665 = vst.msk [vmem:[%s231 + $0x48] sm:$0xff] %vm254, %v1649
        %1666 = vst.msk [vmem:[%s231 + $0x50] sm:$0xff] %vm254, %v1650
        %1667 = vst.msk [vmem:[%s231 + $0x58] sm:$0xff] %vm254, %v1651
        %1668 = vst.msk [vmem:[%s231 + $0x60] sm:$0xff] %vm254, %v1652
        %1669 = vst.msk [vmem:[%s231 + $0x68] sm:$0xff] %vm254, %v1653
        %1670 = vst.msk [vmem:[%s231 + $0x70] sm:$0xff] %vm254, %v1654
        %1671 = vst.msk [vmem:[%s231 + $0x78] sm:$0xff] %vm254, %v1655
        %s1672 = sand.u32 %s138, 1
        %s1673 = scalar_lea.sflag [#allocation3], %s1672
        %s1674 = sand.u32 %s138, 1
        %s1675 = smul.addr %s1674, 128
        %s1676 = scalar_lea.vmem [#allocation5], %s1675
        // Predicated region
        $region45: #{tpu_custom_call.1} parent=39 // pred_check
          %p1677 = pneg %p148
        $region46: #{tpu_custom_call.1} parent=39 // pred_check_branch
          %1679 = sbr.rel (%p1677) target = $region48
        $region47: #{tpu_custom_call.1} parent=39 // pred_region
          %1681 = vsyncadd %s1673, 0
          %s1682 = smul.addr %s20, 16
          %s1683 = smul.addr %s1682, 8
          %s1684 = scalar_lea.hbm %s5, %s1683
          %s1685 = sshll.u32 %s1676, 4
          %s1686 = int_to_ptr.vmem [resolvable:$true] %s1685
          %s1687 = sshll.u32 %s1684, 4
          %s1688 = int_to_ptr.hbm [resolvable:$true] %s1687
          %1693 = dma.vmem_to_hbm [thread:$0]  %s1686, 2048, %s1688, %s1673, 128, 128, 8
        $region48: #{tpu_custom_call.1} parent=39 // pred_fallthru
          _
      $region40: #{tpu_custom_call.1} parent=5 // pred_fallthru
        _
      %p1694 = scmp.le.s32.totalorder 2, %s15
      // Predicated region
      $region49: #{tpu_custom_call.1} parent=5 // pred_check
        %p1695 = pneg %p1694
      $region50: #{tpu_custom_call.1} parent=5 // pred_check_branch
        %1697 = sbr.rel (%p1695) target = $region52
      $region51: #{tpu_custom_call.1} parent=5 // pred_region
        %s1698 = ssub.s32 %s15, 2
        // Predicated region
        $region53: #{tpu_custom_call.1} parent=51 // pred_check
          %p1699 = pneg %p154
        $region54: #{tpu_custom_call.1} parent=51 // pred_check_branch
          %1701 = sbr.rel (%p1699) target = $region56
        $region55: #{tpu_custom_call.1} parent=51 // pred_region
          %s1702 = sand.u32 %s139, 1
          %s1703 = scalar_lea.sflag [#allocation3], %s1702
          %s1704 = sand.u32 %s139, 1
          %s1705 = smul.addr %s1704, 128
          %s1706 = scalar_lea.vmem [#allocation5], %s1705
          %1708 = dma.done %s1703, 2048
        $region56: #{tpu_custom_call.1} parent=51 // pred_fallthru
          _
      $region52: #{tpu_custom_call.1} parent=5 // pred_fallthru
        _
    $region6: #{tpu_custom_call.1} parent=1 // loop_footer
      %s19 = sadd.s32 1, %s15
    $region7: #{tpu_custom_call.1} parent=1 // loop_footer_branch
      %14 = sbr.rel target = $region3
    $region8: #{tpu_custom_call.1} parent=1 // loop_exit
      _
    %1709 = vsyncpa [#allocation3], 1
    %s1710 = scalar_lea.sflag [#allocation3], 1
    %1711 = vsyncpa %s1710, 1
    %1712 = vsyncpa [#allocation4], 1
    %s1713 = scalar_lea.sflag [#allocation4], 1
    %1714 = vsyncpa %s1713, 1

</llo_original>
